<compile_context>
chip_gen: v6e
topology: v6e:2x2x1
jax: 0.10.0
libtpu: 0.0.40
codegen_flags: <defaults>
</compile_context>

<pallas_src>
import functools

import jax
import jax.numpy as jnp
from jax.experimental import pallas as pl
from jax.experimental.pallas import tpu as pltpu

EPS = 1e-5            # nn.BatchNorm2d default eps
EXPANSION = 4         # Bottleneck.expansion
TM_TILED = 512        # M tile for the tiled paths


def _round_up(x, m):
    return ((x + m - 1) // m) * m


def _cdiv(a, b):
    return (a + b - 1) // b


def _tpu_vmem_capacity():
    try:
        return int(pltpu.get_tpu_info().vmem_capacity_bytes)
    except Exception:
        return 64 * 1024 * 1024   # conservative fallback (v7x-sized)


_VMEM_CAP = _tpu_vmem_capacity()
_BIG_VMEM = _VMEM_CAP >= 100 * 1024 * 1024          # v5e/v6e (128 MiB); v7x has 64 MiB
VMEM_LIMIT = (64 if _BIG_VMEM else 32) * 1024 * 1024
FUSED_M_MAX = 4096 if _BIG_VMEM else 2048
FUSED_VMEM_BUDGET = (VMEM_LIMIT * 3) // 5            # gate for the single-pass path


def _pick_tn(coutp):
    for cand in (512, 256, 128):
        if coutp % cand == 0:
            return cand
    return 128


def _fused_tn(coutp):
    """TN for the single-pass path: prefer >=2 Cout blocks (v7x 2 TensorCores)."""
    if coutp >= 256:
        for cand in (512, 256, 128):
            if cand <= coutp // 2 and coutp % cand == 0:
                return cand
    return _pick_tn(coutp)


def _k_tiling(K):
    """Return (K_pad, tk, kt): single full-K step up to 2048, else 512-wide tiles."""
    if K <= 2048:
        return K, K, 1
    K_pad = _round_up(K, 512)
    return K_pad, 512, K_pad // 512


# ---------------------------------------------------------------------------
# Kernel 1: single-pass conv(matmul) + BN(batch stats) + residual + ReLU
#           grid = (Cout_tiles, K_tiles); f32 VMEM scratch accumulator, bf16 out
# ---------------------------------------------------------------------------
def _fused_conv_bn_kernel(*refs, apply_relu, add_residual, m_valid, m_pad_rows):
    if add_residual:
        a_ref, b_ref, g_ref, bt_ref, res_ref, o_ref, acc_ref = refs
    else:
        a_ref, b_ref, g_ref, bt_ref, o_ref, acc_ref = refs
        res_ref = None
    k = pl.program_id(1)

    @pl.when(k == 0)
    def _():
        acc_ref[...] = jnp.zeros_like(acc_ref)

    acc_ref[...] += jnp.dot(a_ref[...], b_ref[...],
                            preferred_element_type=jnp.float32)

    @pl.when(k == pl.num_programs(1) - 1)
    def _():
        y = acc_ref[...]                       # (TM, TN) f32, padded rows are zero
        inv_m = 1.0 / m_valid
        mean = jnp.sum(y, axis=0, keepdims=True) * inv_m
        centered = y - mean
        # exact two-pass variance; each all-zero padded row adds mean^2, remove it.
        var = (jnp.sum(centered * centered, axis=0, keepdims=True)
               - m_pad_rows * mean * mean) * inv_m
        var = jnp.maximum(var, 0.0)
        scale = g_ref[...] * jax.lax.rsqrt(var + EPS)
        out = centered * scale + bt_ref[...]
        if add_residual:
            out = out + res_ref[...].astype(jnp.float32)
        if apply_relu:
            out = jnp.maximum(out, 0.0)
        o_ref[...] = out.astype(o_ref.dtype)


# ---------------------------------------------------------------------------
# Kernel 2: tiled matmul + per-M-tile partial BN stats (sum, sumsq)
#           grid = (M_tiles, Cout_tiles, K_tiles); bf16 y out, f32 scratch acc
# ---------------------------------------------------------------------------
def _matmul_stats_kernel(a_ref, b_ref, y_ref, stats_ref, acc_ref):
    k = pl.program_id(2)

    @pl.when(k == 0)
    def _():
        acc_ref[...] = jnp.zeros_like(acc_ref)

    acc_ref[...] += jnp.dot(a_ref[...], b_ref[...],
                            preferred_element_type=jnp.float32)

    @pl.when(k == pl.num_programs(2) - 1)
    def _():
        y = acc_ref[...]
        y_ref[...] = y.astype(y_ref.dtype)
        tn = y.shape[1]
        s = jnp.broadcast_to(jnp.sum(y, axis=0, keepdims=True), (8, tn))
        sq = jnp.broadcast_to(jnp.sum(y * y, axis=0, keepdims=True), (8, tn))
        row = jax.lax.broadcasted_iota(jnp.int32, (8, tn), 0)
        stats_ref[...] = jnp.where(row == 0, s, jnp.where(row == 1, sq, 0.0))


# ---------------------------------------------------------------------------
# Kernel 3: fused-tap stride-1 KxK conv (no im2col in HBM) + partial BN stats
#           grid = (M_tiles, Cout_tiles); halo slab DMA'd from HBM per M tile
# ---------------------------------------------------------------------------
def _conv_tap_stats_kernel(x_hbm, w_ref, mask_ref, y_ref, stats_ref, abuf,
                           *, tap_offsets, tm, tma):
    i = pl.program_id(0)

    @pl.when(pl.program_id(1) == 0)            # slab is reused across Cout tiles
    def _():
        row0 = pl.multiple_of(i * tm, 8)
        pltpu.sync_copy(x_hbm.at[pl.ds(row0, tma)], abuf)

    acc = jnp.zeros(y_ref.shape, jnp.float32)
    for t, off in enumerate(tap_offsets):       # static 9-tap unroll
        acc = acc + jnp.dot(abuf[off:off + tm, :], w_ref[t],
                            preferred_element_type=jnp.float32)
    y_ref[...] = acc.astype(y_ref.dtype)

    m = mask_ref[...]                           # (tm, 1) validity mask
    tn = acc.shape[1]
    s = jnp.broadcast_to(jnp.sum(acc * m, axis=0, keepdims=True), (8, tn))
    sq = jnp.broadcast_to(jnp.sum(acc * acc * m, axis=0, keepdims=True), (8, tn))
    row = jax.lax.broadcasted_iota(jnp.int32, (8, tn), 0)
    stats_ref[...] = jnp.where(row == 0, s, jnp.where(row == 1, sq, 0.0))


# ---------------------------------------------------------------------------
# Kernel 4: fused BN scale/shift + residual + ReLU epilogue (bf16 in/out)
# ---------------------------------------------------------------------------
def _bn_epilogue_kernel(*refs, apply_relu, add_residual):
    if add_residual:
        y_ref, sc_ref, sh_ref, res_ref, o_ref = refs
    else:
        y_ref, sc_ref, sh_ref, o_ref = refs
        res_ref = None
    out = y_ref[...].astype(jnp.float32) * sc_ref[...] + sh_ref[...]
    if add_residual:
        out = out + res_ref[...].astype(jnp.float32)
    if apply_relu:
        out = jnp.maximum(out, 0.0)
    o_ref[...] = out.astype(o_ref.dtype)


# ---------------------------------------------------------------------------
# Kernel 5: MaxPool2d 9-tap max (bf16, lane-dense)
# ---------------------------------------------------------------------------
def _maxpool_kernel(t_ref, o_ref):
    o_ref[...] = jnp.max(t_ref[...], axis=0)


# ---------------------------------------------------------------------------
# Shared matmul + BN wrappers
# ---------------------------------------------------------------------------
def _bn_scale_shift(stats, mt, coutp, m_valid, gamma2, beta2):
    stats = stats.reshape(mt, 8, coutp)
    mean = jnp.sum(stats[:, 0, :], axis=0, keepdims=True) / m_valid
    ex2 = jnp.sum(stats[:, 1, :], axis=0, keepdims=True) / m_valid
    # TODO(synk): one-pass E[x^2]-mean^2 in f32 may lose precision for very
    # large activation means (guarded with max(.,0)); exact in the fused path.
    var = jnp.maximum(ex2 - mean * mean, 0.0)
    scale = gamma2 * jax.lax.rsqrt(var + EPS)
    shift = beta2 - mean * scale
    return scale, shift


def _bn_epilogue(y, scale, shift, residual2d, *, relu, tm, tn):
    m_pad, coutp = y.shape
    mt, nt = m_pad // tm, coutp // tn
    add_res = residual2d is not None
    kernel = functools.partial(_bn_epilogue_kernel, apply_relu=relu,
                               add_residual=add_res)
    in_specs = [pl.BlockSpec((tm, tn), lambda i, j: (i, j)),
                pl.BlockSpec((1, tn), lambda i, j: (0, j)),
                pl.BlockSpec((1, tn), lambda i, j: (0, j))]
    args = [y, scale, shift]
    if add_res:
        in_specs.append(pl.BlockSpec((tm, tn), lambda i, j: (i, j)))
        args.append(residual2d)
    return pl.pallas_call(
        kernel,
        out_shape=jax.ShapeDtypeStruct((m_pad, coutp), jnp.bfloat16),
        grid_spec=pltpu.PrefetchScalarGridSpec(
            num_scalar_prefetch=0,
            grid=(mt, nt),
            in_specs=in_specs,
            out_specs=pl.BlockSpec((tm, tn), lambda i, j: (i, j))),
        compiler_params=pltpu.CompilerParams(
            dimension_semantics=("parallel", "parallel"),
            vmem_limit_bytes=VMEM_LIMIT),
    )(*args)


def _matmul_bn(a, b, gamma2, beta2, cout, *, relu, residual2d):
    """a:(M,K) bf16, b:(K,cout) bf16 -> (M,cout) bf16 with train-mode BN."""
    M, K = a.shape
    coutp = _round_up(cout, 128)
    if coutp != cout:
        b = jnp.pad(b, ((0, 0), (0, coutp - cout)))
    K_pad, tk, kt = _k_tiling(K)
    if K_pad != K:
        a = jnp.pad(a, ((0, 0), (0, K_pad - K)))
        b = jnp.pad(b, ((0, K_pad - K), (0, 0)))

    add_res = residual2d is not None
    r = residual2d
    if add_res and coutp != cout:
        r = jnp.pad(r, ((0, 0), (0, coutp - cout)))

    # ---- single-pass fused path (whole M column resident in VMEM) ----
    tm_f = _round_up(M, 8)
    tn_f = _fused_tn(coutp)
    fused_bytes = (tm_f * tn_f * 4                          # f32 accumulator
                   + 2 * tm_f * tk * 2 + 2 * tk * tn_f * 2  # A / B double buffers
                   + 2 * tm_f * tn_f * 2                    # bf16 out double buffer
                   + (2 * tm_f * tn_f * 2 if add_res else 0))
    if tm_f <= FUSED_M_MAX and fused_bytes <= FUSED_VMEM_BUDGET:
        TM, TN = tm_f, tn_f
        if TM != M:
            a = jnp.pad(a, ((0, TM - M), (0, 0)))
            if add_res:
                r = jnp.pad(r, ((0, TM - M), (0, 0)))
        nt = coutp // TN
        kernel = functools.partial(_fused_conv_bn_kernel, apply_relu=relu,
                                   add_residual=add_res, m_valid=float(M),
                                   m_pad_rows=float(TM - M))
        in_specs = [pl.BlockSpec((TM, tk), lambda j, k: (0, k)),
                    pl.BlockSpec((tk, TN), lambda j, k: (k, j)),
                    pl.BlockSpec((1, TN), lambda j, k: (0, j)),
                    pl.BlockSpec((1, TN), lambda j, k: (0, j))]
        args = [a, b, gamma2, beta2]
        if add_res:
            in_specs.append(pl.BlockSpec((TM, TN), lambda j, k: (0, j)))
            args.append(r)
        out = pl.pallas_call(
            kernel,
            out_shape=jax.ShapeDtypeStruct((TM, coutp), jnp.bfloat16),
            grid_spec=pltpu.PrefetchScalarGridSpec(
                num_scalar_prefetch=0,
                grid=(nt, kt),
                in_specs=in_specs,
                out_specs=pl.BlockSpec((TM, TN), lambda j, k: (0, j)),
                scratch_shapes=[pltpu.VMEM((TM, TN), jnp.float32)]),
            compiler_params=pltpu.CompilerParams(
                dimension_semantics=("parallel", "arbitrary"),
                vmem_limit_bytes=VMEM_LIMIT),
        )(*args)
        return out[:M, :cout]

    # ---- two-phase path: tiled matmul + partial stats, then BN epilogue ----
    TM = TM_TILED
    TN = _pick_tn(coutp)
    M_pad = _round_up(M, TM)
    if M_pad != M:
        a = jnp.pad(a, ((0, M_pad - M), (0, 0)))
        if add_res:
            r = jnp.pad(r, ((0, M_pad - M), (0, 0)))
    mt, nt = M_pad // TM, coutp // TN

    y, stats = pl.pallas_call(
        _matmul_stats_kernel,
        out_shape=(jax.ShapeDtypeStruct((M_pad, coutp), jnp.bfloat16),
                   jax.ShapeDtypeStruct((mt * 8, coutp), jnp.float32)),
        grid_spec=pltpu.PrefetchScalarGridSpec(
            num_scalar_prefetch=0,
            grid=(mt, nt, kt),
            in_specs=[pl.BlockSpec((TM, tk), lambda i, j, k: (i, k)),
                      pl.BlockSpec((tk, TN), lambda i, j, k: (k, j))],
            out_specs=(pl.BlockSpec((TM, TN), lambda i, j, k: (i, j)),
                       pl.BlockSpec((8, TN), lambda i, j, k: (i, j))),
            scratch_shapes=[pltpu.VMEM((TM, TN), jnp.float32)]),
        compiler_params=pltpu.CompilerParams(
            dimension_semantics=("parallel", "parallel", "arbitrary"),
            vmem_limit_bytes=VMEM_LIMIT),
    )(a, b)

    scale, shift = _bn_scale_shift(stats, mt, coutp, float(M), gamma2, beta2)
    out = _bn_epilogue(y, scale, shift, r, relu=relu, tm=TM, tn=TN)
    return out[:M, :cout]


# ---------------------------------------------------------------------------
# Fused-tap stride-1 KxK conv + BN + ReLU (no im2col materialization)
# ---------------------------------------------------------------------------
def _conv_tap_bn(x16, w16, gamma2, beta2, cout, *, padding, dilation, relu):
    N, H, W, Cin = x16.shape
    KH, KW, _, _ = w16.shape
    p, d = padding, dilation
    Hp, Wp = H + 2 * p, W + 2 * p
    OH = Hp - d * (KH - 1)
    OW = Wp - d * (KW - 1)
    coutp = _round_up(cout, 128)
    M2 = N * Hp * Wp                 # rows of the shifted matmul (incl. edge garbage)
    M_true = N * OH * OW             # true output count (BN divisor)

    xp = jnp.pad(x16, ((0, 0), (p, p), (p, p), (0, 0)))
    x2 = xp.reshape(M2, Cin)

    tap_offsets = tuple(kh * d * Wp + kw * d
                        for kh in range(KH) for kw in range(KW))
    off_max = tap_offsets[-1]

    TM = min(TM_TILED, _round_up(M2, 8))
    mt = _cdiv(M2, TM)
    M_out = mt * TM
    TMA = _round_up(TM + off_max, 8)           # halo slab height per M tile
    M_in = (mt - 1) * TM + TMA
    x2 = jnp.pad(x2, ((0, M_in - M2), (0, 0)))

    wr = w16.reshape(KH * KW, Cin, cout)
    if coutp != cout:
        wr = jnp.pad(wr, ((0, 0), (0, 0), (0, coutp - cout)))

    # validity mask: rows that map to a real (n, oh<OH, ow<OW) output position
    r = jnp.arange(M_out, dtype=jnp.int32)
    rr = r % (Hp * Wp)
    valid = (r < M2) & (rr // Wp < OH) & (rr % Wp < OW)
    mask = valid.astype(jnp.float32).reshape(M_out, 1)

    TN = _pick_tn(coutp)
    nt = coutp // TN

    kernel = functools.partial(_conv_tap_stats_kernel,
                               tap_offsets=tap_offsets, tm=TM, tma=TMA)
    y, stats = pl.pallas_call(
        kernel,
        out_shape=(jax.ShapeDtypeStruct((M_out, coutp), jnp.bfloat16),
                   jax.ShapeDtypeStruct((mt * 8, coutp), jnp.float32)),
        grid_spec=pltpu.PrefetchScalarGridSpec(
            num_scalar_prefetch=0,
            grid=(mt, nt),
            in_specs=[pl.BlockSpec(memory_space=pl.ANY),                    # x2 (HBM)
                      pl.BlockSpec((KH * KW, Cin, TN), lambda i, j: (0, 0, j)),
                      pl.BlockSpec((TM, 1), lambda i, j: (i, 0))],          # mask
            out_specs=(pl.BlockSpec((TM, TN), lambda i, j: (i, j)),
                       pl.BlockSpec((8, TN), lambda i, j: (i, j))),
            scratch_shapes=[pltpu.VMEM((TMA, Cin), jnp.bfloat16)]),
        compiler_params=pltpu.CompilerParams(
            dimension_semantics=("parallel", "arbitrary"),
            vmem_limit_bytes=VMEM_LIMIT),
    )(x2, wr, mask)

    scale, shift = _bn_scale_shift(stats, mt, coutp, float(M_true), gamma2, beta2)
    out = _bn_epilogue(y, scale, shift, None, relu=relu, tm=TM, tn=TN)
    out = out[:M2].reshape(N, Hp, Wp, coutp)[:, :OH, :OW, :cout]
    return out


# ---------------------------------------------------------------------------
# conv + BN (+residual, +ReLU) dispatcher
# ---------------------------------------------------------------------------
def conv_bn(x, w, gamma, beta, *, stride=1, padding=0, dilation=1,
            relu=True, residual=None):
    """x:(N,H,W,Cin), w:(KH,KW,Cin,Cout) -> (N,OH,OW,Cout) bf16 with BN(+res,+ReLU)."""
    N, H, W, Cin = x.shape
    KH, KW, _, Cout = w.shape
    OH = (H + 2 * padding - dilation * (KH - 1) - 1) // stride + 1
    OW = (W + 2 * padding - dilation * (KW - 1) - 1) // stride + 1
    M = N * OH * OW

    x16 = x.astype(jnp.bfloat16)
    w16 = w.astype(jnp.bfloat16)
    coutp = _round_up(Cout, 128)
    g2 = jnp.pad(gamma.astype(jnp.float32), (0, coutp - Cout)).reshape(1, coutp)
    bt2 = jnp.pad(beta.astype(jnp.float32), (0, coutp - Cout)).reshape(1, coutp)

    res2d = None
    if residual is not None:
        res2d = residual.astype(jnp.bfloat16).reshape(M, Cout)

    if KH == 1 and KW == 1:
        if stride != 1:
            x16 = x16[:, ::stride, ::stride, :]
        a = x16.reshape(M, Cin)                 # no im2col glue for 1x1 convs
        out2d = _matmul_bn(a, w16.reshape(Cin, Cout), g2, bt2, Cout,
                           relu=relu, residual2d=res2d)
        return out2d.reshape(N, OH, OW, Cout)

    if stride == 1:
        assert residual is None
        return _conv_tap_bn(x16, w16, g2, bt2, Cout,
                            padding=padding, dilation=dilation, relu=relu)

    # strided KxK conv (7x7/s2 stem, layer2's 3x3/s2): im2col fallback
    assert residual is None
    xpad = jnp.pad(x16, ((0, 0), (padding, padding), (padding, padding), (0, 0)))
    taps = []
    for kh in range(KH):
        for kw in range(KW):
            h0, w0 = kh * dilation, kw * dilation
            taps.append(xpad[:, h0:h0 + stride * (OH - 1) + 1:stride,
                             w0:w0 + stride * (OW - 1) + 1:stride, :])
    a = jnp.stack(taps, axis=3).reshape(M, KH * KW * Cin)
    b = w16.reshape(KH * KW * Cin, Cout)
    out2d = _matmul_bn(a, b, g2, bt2, Cout, relu=relu, residual2d=res2d)
    return out2d.reshape(N, OH, OW, Cout)


# ---------------------------------------------------------------------------
# MaxPool2d(kernel=3, stride=2, padding=1)
# ---------------------------------------------------------------------------
def maxpool_3x3_s2_p1(x):
    N, H, W, C = x.shape
    s, k, p = 2, 3, 1
    OH = (H + 2 * p - k) // s + 1
    OW = (W + 2 * p - k) // s + 1
    x16 = x.astype(jnp.bfloat16)
    xp = jnp.pad(x16, ((0, 0), (p, p), (p, p), (0, 0)),
                 constant_values=-jnp.inf)
    taps = []
    for kh in range(k):
        for kw in range(k):
            taps.append(xp[:, kh:kh + s * (OH - 1) + 1:s,
                           kw:kw + s * (OW - 1) + 1:s, :])
    M = N * OH * OW
    t = jnp.stack(taps, axis=0).reshape(k * k, M, C)

    # fold pairs of rows into the lane axis so output stores are >=128 lanes
    fold = 2 if (M % 2 == 0 and C < 128) else 1
    Mf, Cl = M // fold, C * fold
    t = t.reshape(k * k, Mf, Cl)

    TM = min(1024, _round_up(Mf, 8))
    Mf_pad = _round_up(Mf, TM)
    if Mf_pad != Mf:
        t = jnp.pad(t, ((0, 0), (0, Mf_pad - Mf), (0, 0)),
                    constant_values=-jnp.inf)

    # TODO(synk): the 9 tap slices are still materialized by XLA; fusing them
    # would need strided (s=2) halo reads inside the kernel like the conv path.
    out = pl.pallas_call(
        _maxpool_kernel,
        out_shape=jax.ShapeDtypeStruct((Mf_pad, Cl), jnp.bfloat16),
        grid_spec=pltpu.PrefetchScalarGridSpec(
            num_scalar_prefetch=0,
            grid=(Mf_pad // TM,),
            in_specs=[pl.BlockSpec((k * k, TM, Cl), lambda i: (0, i, 0))],
            out_specs=pl.BlockSpec((TM, Cl), lambda i: (i, 0))),
        compiler_params=pltpu.CompilerParams(
            dimension_semantics=("parallel",),
            vmem_limit_bytes=VMEM_LIMIT),
    )(t)
    return out[:Mf].reshape(N, OH, OW, C)


# ---------------------------------------------------------------------------
# Parameters (deterministic, kaiming_normal fan_out like torch init)
# ---------------------------------------------------------------------------
def _kaiming(key, kh, kw, cin, cout):
    std = (2.0 / (cout * kh * kw)) ** 0.5
    return jax.random.normal(key, (kh, kw, cin, cout), jnp.float32) * std


def _bn_params(c):
    return jnp.ones((c,), jnp.float32), jnp.zeros((c,), jnp.float32)


def make_bottleneck_params(key, inplanes, planes, stride, pd, has_downsample):
    keys = jax.random.split(key, 4)
    p = {
        'conv1_w': _kaiming(keys[0], 1, 1, inplanes, planes),
        'bn1': _bn_params(planes),
        'conv2_w': _kaiming(keys[1], 3, 3, planes, planes),
        'bn2': _bn_params(planes),
        'conv3_w': _kaiming(keys[2], 1, 1, planes, planes * EXPANSION),
        'bn3': _bn_params(planes * EXPANSION),
        'stride': stride,
        'pd': pd,
        'has_downsample': has_downsample,
    }
    if has_downsample:
        p['ds_w'] = _kaiming(keys[3], 1, 1, inplanes, planes * EXPANSION)
        p['ds_bn'] = _bn_params(planes * EXPANSION)
    return p


def make_resnet_params(key, layers):
    keys = jax.random.split(key, 5)
    params = {'conv1_w': _kaiming(keys[0], 7, 7, 3, 64), 'bn1': _bn_params(64)}
    inplanes = 64
    layer_cfg = [(64, layers[0], 1, None),
                 (128, layers[1], 2, None),
                 (256, layers[2], 1, 2),
                 (512, layers[3], 1, 4)]
    for li, (planes, blocks, stride, pd) in enumerate(layer_cfg):
        bkeys = jax.random.split(keys[li + 1], blocks)
        has_ds = (stride != 1) or (inplanes != planes * EXPANSION)
        # first block of each layer: pd is not passed in _make_layer -> pd=None
        blist = [make_bottleneck_params(bkeys[0], inplanes, planes, stride,
                                        None, has_ds)]
        inplanes = planes * EXPANSION
        for bi in range(1, blocks):
            blist.append(make_bottleneck_params(bkeys[bi], inplanes, planes,
                                                1, pd, False))
        params[f'layer{li + 1}'] = blist
    return params


# ---------------------------------------------------------------------------
# Forward pass
# ---------------------------------------------------------------------------
def bottleneck_forward(x, p):
    identity = x
    g1, b1 = p['bn1']
    g2, b2 = p['bn2']
    g3, b3 = p['bn3']

    out = conv_bn(x, p['conv1_w'], g1, b1, stride=1, padding=0, dilation=1,
                  relu=True)
    pd = p['pd']
    if pd is None:
        out = conv_bn(out, p['conv2_w'], g2, b2, stride=p['stride'],
                      padding=1, dilation=1, relu=True)
    else:
        out = conv_bn(out, p['conv2_w'], g2, b2, stride=p['stride'],
                      padding=pd, dilation=pd, relu=True)
    if p['has_downsample']:
        gd, bd = p['ds_bn']
        identity = conv_bn(x, p['ds_w'], gd, bd, stride=p['stride'],
                           padding=0, dilation=1, relu=False)
    out = conv_bn(out, p['conv3_w'], g3, b3, stride=1, padding=0, dilation=1,
                  relu=True, residual=identity)
    return out


def resnet_forward(x_nchw, params):
    x = jnp.transpose(x_nchw, (0, 2, 3, 1))     # NCHW -> NHWC for the kernels
    g, b = params['bn1']
    res1 = conv_bn(x, params['conv1_w'], g, b, stride=2, padding=3,
                   dilation=1, relu=True)
    x = maxpool_3x3_s2_p1(res1)
    feats = []
    for li in range(1, 5):
        for bp in params[f'layer{li}']:
            x = bottleneck_forward(x, bp)
        feats.append(x)
    res2, res3, res4, res5 = feats
    to_nchw = lambda t: jnp.transpose(t, (0, 3, 1, 2)).astype(jnp.float32)
    return tuple(to_nchw(t) for t in (res1, res2, res3, res4, res5))


# ---------------------------------------------------------------------------
if __name__ == "__main__":
    key = jax.random.PRNGKey(0)
    pkey, xkey = jax.random.split(key)

    # ResNet(Bottleneck, layers=[1, 1, 2, 2]): exercises the strided stem/layer2
    # (im2col path), the fused-tap stride-1 3x3 path (d=1,2,4), downsample and
    # residual fusion, and the single-pass fused BN path.
    params = make_resnet_params(pkey, layers=[1, 1, 2, 2])

    x = jax.random.normal(xkey, (2, 3, 32, 32), jnp.float32)  # NCHW like PyTorch
    outs = resnet_forward(x, params)
    outs = jax.block_until_ready(outs)

    expected = [(2, 64, 16, 16), (2, 256, 8, 8), (2, 512, 4, 4),
                (2, 1024, 4, 4), (2, 2048, 4, 4)]
    assert [tuple(o.shape) for o in outs] == expected, \
        [tuple(o.shape) for o in outs]
    assert all(bool(jnp.all(jnp.isfinite(o))) for o in outs)
    print("KERNEL_OK")
</pallas_src>

<mosaic_0001>
module attributes {stable_mosaic.version = 11 : i64} {
  func.func @_fused_conv_bn_kernel(%arg0: i32, %arg1: i32, %arg2: memref<512x147xbf16, #tpu.memory_space<vmem>>, %arg3: memref<147x128xbf16, #tpu.memory_space<vmem>>, %arg4: memref<1x128xf32, #tpu.memory_space<vmem>>, %arg5: memref<1x128xf32, #tpu.memory_space<vmem>>, %arg6: memref<512x128xbf16, #tpu.memory_space<vmem>>, %arg7: memref<512x128xf32, #tpu.memory_space<vmem>>) attributes {dimension_semantics = [#tpu.dimension_semantics<parallel>, #tpu.dimension_semantics<arbitrary>], iteration_bounds = array<i64: 1, 1>, scalar_prefetch = 0 : i64, scratch_operands = 1 : i64, tpu.core_type = #tpu.core_type<tc>, window_params = [{transform_indices = @transform_0, window_bounds = array<i64: 512, 147>}, {transform_indices = @transform_1, window_bounds = array<i64: 147, 128>}, {transform_indices = @transform_2, window_bounds = array<i64: 1, 128>}, {transform_indices = @transform_3, window_bounds = array<i64: 1, 128>}, {transform_indices = @transform_4, window_bounds = array<i64: 512, 128>}]} {
    %c0_i32 = arith.constant 0 : i32
    %0 = arith.cmpi eq, %arg1, %c0_i32 : i32
    %1 = arith.extui %0 : i1 to i32
    %c0_i32_0 = arith.constant 0 : i32
    %2 = arith.cmpi ne, %1, %c0_i32_0 : i32
    scf.if %2 {
      %cst_10 = arith.constant 0.000000e+00 : f32
      %12 = vector.broadcast %cst_10 : f32 to vector<512x128xf32>
      %c0_11 = arith.constant 0 : index
      %c0_12 = arith.constant 0 : index
      %13 = vector.load %arg7[%c0_11, %c0_12] : memref<512x128xf32, #tpu.memory_space<vmem>>, vector<512x128xf32>
      tpu.vector_store %arg7[%c0_11, %c0_12], %12 {strides = array<i32>} : memref<512x128xf32, #tpu.memory_space<vmem>>, vector<512x128xf32>,
    } else {
    }
    %c0 = arith.constant 0 : index
    %c0_1 = arith.constant 0 : index
    %3 = vector.load %arg7[%c0, %c0_1] : memref<512x128xf32, #tpu.memory_space<vmem>>, vector<512x128xf32>
    %c0_2 = arith.constant 0 : index
    %c0_3 = arith.constant 0 : index
    %4 = vector.load %arg2[%c0_2, %c0_3] : memref<512x147xbf16, #tpu.memory_space<vmem>>, vector<512x147xbf16>
    %c0_4 = arith.constant 0 : index
    %c0_5 = arith.constant 0 : index
    %5 = vector.load %arg3[%c0_4, %c0_5] : memref<147x128xbf16, #tpu.memory_space<vmem>>, vector<147x128xbf16>
    %cst = arith.constant dense<0.000000e+00> : vector<512x128xf32>
    %6 = tpu.matmul %4, %5, %cst {dimension_numbers = #tpu.dot_dimension_numbers<[1], [0], [0], [1], [0, 0, 1, 1], [], []>} : vector<512x147xbf16>, vector<147x128xbf16>, vector<512x128xf32> -> vector<512x128xf32>
    %7 = arith.addf %3, %6 : vector<512x128xf32>
    %c0_6 = arith.constant 0 : index
    %c0_7 = arith.constant 0 : index
    %8 = vector.load %arg7[%c0_6, %c0_7] : memref<512x128xf32, #tpu.memory_space<vmem>>, vector<512x128xf32>
    tpu.vector_store %arg7[%c0_6, %c0_7], %7 {strides = array<i32>} : memref<512x128xf32, #tpu.memory_space<vmem>>, vector<512x128xf32>,
    %c0_i32_8 = arith.constant 0 : i32
    %9 = arith.cmpi eq, %arg1, %c0_i32_8 : i32
    %10 = arith.extui %9 : i1 to i32
    %c0_i32_9 = arith.constant 0 : i32
    %11 = arith.cmpi ne, %10, %c0_i32_9 : i32
    scf.if %11 {
      %c0_10 = arith.constant 0 : index
      %c0_11 = arith.constant 0 : index
      %12 = vector.load %arg7[%c0_10, %c0_11] : memref<512x128xf32, #tpu.memory_space<vmem>>, vector<512x128xf32>
      %cst_12 = arith.constant dense<0.000000e+00> : vector<128xf32>
      %13 = vector.multi_reduction <add>, %12, %cst_12 [0] : vector<512x128xf32> to vector<128xf32>
      %14 = vector.shape_cast %13 : vector<128xf32> to vector<1x128xf32>
      %cst_13 = arith.constant 0.001953125 : f32
      %15 = vector.broadcast %cst_13 : f32 to vector<1x128xf32>
      %16 = arith.mulf %14, %15 : vector<1x128xf32>
      %17 = vector.broadcast %16 : vector<1x128xf32> to vector<512x128xf32>
      %18 = arith.subf %12, %17 : vector<512x128xf32>
      %19 = arith.mulf %18, %18 : vector<512x128xf32>
      %cst_14 = arith.constant dense<0.000000e+00> : vector<128xf32>
      %20 = vector.multi_reduction <add>, %19, %cst_14 [0] : vector<512x128xf32> to vector<128xf32>
      %21 = vector.shape_cast %20 : vector<128xf32> to vector<1x128xf32>
      %cst_15 = arith.constant 0.000000e+00 : f32
      %22 = vector.broadcast %cst_15 : f32 to vector<1x128xf32>
      %23 = arith.mulf %22, %16 : vector<1x128xf32>
      %24 = arith.mulf %23, %16 : vector<1x128xf32>
      %25 = arith.subf %21, %24 : vector<1x128xf32>
      %cst_16 = arith.constant 0.001953125 : f32
      %26 = vector.broadcast %cst_16 : f32 to vector<1x128xf32>
      %27 = arith.mulf %25, %26 : vector<1x128xf32>
      %cst_17 = arith.constant 0.000000e+00 : f32
      %28 = vector.broadcast %cst_17 : f32 to vector<1x128xf32>
      %29 = arith.maximumf %27, %28 : vector<1x128xf32>
      %c0_18 = arith.constant 0 : index
      %c0_19 = arith.constant 0 : index
      %30 = vector.load %arg4[%c0_18, %c0_19] : memref<1x128xf32, #tpu.memory_space<vmem>>, vector<1x128xf32>
      %cst_20 = arith.constant 9.99999974E-6 : f32
      %31 = vector.broadcast %cst_20 : f32 to vector<1x128xf32>
      %32 = arith.addf %29, %31 : vector<1x128xf32>
      %33 = math.rsqrt %32 : vector<1x128xf32>
      %34 = arith.mulf %30, %33 : vector<1x128xf32>
      %35 = vector.broadcast %34 : vector<1x128xf32> to vector<512x128xf32>
      %36 = arith.mulf %18, %35 : vector<512x128xf32>
      %c0_21 = arith.constant 0 : index
      %c0_22 = arith.constant 0 : index
      %37 = vector.load %arg5[%c0_21, %c0_22] : memref<1x128xf32, #tpu.memory_space<vmem>>, vector<1x128xf32>
      %38 = vector.broadcast %37 : vector<1x128xf32> to vector<512x128xf32>
      %39 = arith.addf %36, %38 : vector<512x128xf32>
      %cst_23 = arith.constant 0.000000e+00 : f32
      %40 = vector.broadcast %cst_23 : f32 to vector<512x128xf32>
      %41 = arith.maximumf %39, %40 : vector<512x128xf32>
      %42 = arith.truncf %41 : vector<512x128xf32> to vector<512x128xbf16>
      %c0_24 = arith.constant 0 : index
      %c0_25 = arith.constant 0 : index
      %43 = vector.load %arg6[%c0_24, %c0_25] : memref<512x128xbf16, #tpu.memory_space<vmem>>, vector<512x128xbf16>
      tpu.vector_store %arg6[%c0_24, %c0_25], %42 {strides = array<i32>} : memref<512x128xbf16, #tpu.memory_space<vmem>>, vector<512x128xbf16>,
    } else {
    }
    return
  }
  func.func @transform_0(%arg0: i32, %arg1: i32) -> (i32, i32) {
    %c0_i32 = arith.constant 0 : i32
    %c0_i32_0 = arith.constant 0 : i32
    return %c0_i32, %arg1 : i32, i32
  }
  func.func @transform_1(%arg0: i32, %arg1: i32) -> (i32, i32) {
    %c0_i32 = arith.constant 0 : i32
    return %arg1, %arg0 : i32, i32
  }
  func.func @transform_2(%arg0: i32, %arg1: i32) -> (i32, i32) {
    %c0_i32 = arith.constant 0 : i32
    %c0_i32_0 = arith.constant 0 : i32
    return %c0_i32, %arg0 : i32, i32
  }
  func.func @transform_3(%arg0: i32, %arg1: i32) -> (i32, i32) {
    %c0_i32 = arith.constant 0 : i32
    %c0_i32_0 = arith.constant 0 : i32
    return %c0_i32, %arg0 : i32, i32
  }
  func.func @transform_4(%arg0: i32, %arg1: i32) -> (i32, i32) {
    %c0_i32 = arith.constant 0 : i32
    %c0_i32_0 = arith.constant 0 : i32
    return %c0_i32, %arg0 : i32, i32
  }
}

</mosaic_0001>

<llo_original>
// kernel: tpu_custom_call.1
$region0: #{tpu_custom_call.1}
  #allocation0 [shape = 'u32[]', space=smem, size = 0x4, offset = 0x4, fixed_abs, tag = 'smem constant byte address 0x4 - core index']
  #allocation1 [shape = 'u32[144,128]{1,0:T(1,128)}', space=vmem, size = 0x12000, scoped, tag = 'internal scratch']
  #allocation2 [shape = 'f32[512,128]{1,0:T(8,128)}', space=vmem, size = 0x40000, scoped, tag = 'scratch operand']
  %s0 = inlined_call_operand.vmem [shape: bf16[512,147], index: 0, kind: input, shape index: {}]
  %s1 = inlined_call_operand.vmem [shape: bf16[147,128], index: 1, kind: input, shape index: {}]
  %s2 = inlined_call_operand.vmem [shape: f32[1,128], index: 2, kind: input, shape index: {}]
  %s3 = inlined_call_operand.vmem [shape: f32[1,128], index: 3, kind: input, shape index: {}]
  %s4 = inlined_call_operand.hbm [shape: bf16[512,128], index: 4, kind: output, shape index: {}]
  %s5 = sld [smem:[#allocation0]]
  $region34: #{tpu_custom_call.1} parent=0
    _
  %s7 = ssub.s32 1, %s5
  %s8 = scalar_select 0, %s7, %s5
  $region1: #{tpu_custom_call.1} parent=0
    #allocation3 [shape = 'u8[131072]{0}', space=vmem, size = 0x20000, scoped, tag = 'output window, operand 0, single buffered']
    #allocation4 [shape = 's32[1]{0}', space=sflag, size = 0x4, scoped, tag = 'scoped memory for tpu_custom_call.1']
    %9 = vsyncpa [#allocation4], 0
    // Predicated region
    $region2: #{tpu_custom_call.1} parent=1 // pred_check
      _
    $region3: #{tpu_custom_call.1} parent=1 // pred_check_branch
      %11 = sbr.rel (0) target = $region5
    $region4: #{tpu_custom_call.1} parent=1 // pred_region
      _
    $region5: #{tpu_custom_call.1} parent=1 // pred_fallthru
      _
    // Predicated region
    $region6: #{tpu_custom_call.1} parent=1 // pred_check
      _
    $region7: #{tpu_custom_call.1} parent=1 // pred_check_branch
      %13 = sbr.rel (0) target = $region9
    $region8: #{tpu_custom_call.1} parent=1 // pred_region
      _
    $region9: #{tpu_custom_call.1} parent=1 // pred_fallthru
      _
    // Predicated region
    $region10: #{tpu_custom_call.1} parent=1 // pred_check
      _
    $region11: #{tpu_custom_call.1} parent=1 // pred_check_branch
      %15 = sbr.rel (0) target = $region13
    $region12: #{tpu_custom_call.1} parent=1 // pred_region
      _
    $region13: #{tpu_custom_call.1} parent=1 // pred_fallthru
      _
    // Predicated region
    $region14: #{tpu_custom_call.1} parent=1 // pred_check
      _
    $region15: #{tpu_custom_call.1} parent=1 // pred_check_branch
      %17 = sbr.rel (0) target = $region17
    $region16: #{tpu_custom_call.1} parent=1 // pred_region
      _
    $region17: #{tpu_custom_call.1} parent=1 // pred_fallthru
      _
    %p19 = scmp.eq.s32.totalorder 0, 0
    // Predicated region
    $region18: #{tpu_custom_call.1} parent=1 // pred_check
      %p20 = pneg %p19
    $region19: #{tpu_custom_call.1} parent=1 // pred_check_branch
      %22 = sbr.rel (%p20) target = $region21
    $region20: #{tpu_custom_call.1} parent=1 // pred_region
      %23 = vst [vmem:[#allocation2] sm:$0xff] 0.0
      %24 = vst [vmem:[#allocation2 + $0x8] sm:$0xff] 0.0
      %25 = vst [vmem:[#allocation2 + $0x10] sm:$0xff] 0.0
      %26 = vst [vmem:[#allocation2 + $0x18] sm:$0xff] 0.0
      %27 = vst [vmem:[#allocation2 + $0x20] sm:$0xff] 0.0
      %28 = vst [vmem:[#allocation2 + $0x28] sm:$0xff] 0.0
      %29 = vst [vmem:[#allocation2 + $0x30] sm:$0xff] 0.0
      %30 = vst [vmem:[#allocation2 + $0x38] sm:$0xff] 0.0
      %31 = vst [vmem:[#allocation2 + $0x40] sm:$0xff] 0.0
      %32 = vst [vmem:[#allocation2 + $0x48] sm:$0xff] 0.0
      %33 = vst [vmem:[#allocation2 + $0x50] sm:$0xff] 0.0
      %34 = vst [vmem:[#allocation2 + $0x58] sm:$0xff] 0.0
      %35 = vst [vmem:[#allocation2 + $0x60] sm:$0xff] 0.0
      %36 = vst [vmem:[#allocation2 + $0x68] sm:$0xff] 0.0
      %37 = vst [vmem:[#allocation2 + $0x70] sm:$0xff] 0.0
      %38 = vst [vmem:[#allocation2 + $0x78] sm:$0xff] 0.0
      %39 = vst [vmem:[#allocation2 + $0x80] sm:$0xff] 0.0
      %40 = vst [vmem:[#allocation2 + $0x88] sm:$0xff] 0.0
      %41 = vst [vmem:[#allocation2 + $0x90] sm:$0xff] 0.0
      %42 = vst [vmem:[#allocation2 + $0x98] sm:$0xff] 0.0
      %43 = vst [vmem:[#allocation2 + $0xa0] sm:$0xff] 0.0
      %44 = vst [vmem:[#allocation2 + $0xa8] sm:$0xff] 0.0
      %45 = vst [vmem:[#allocation2 + $0xb0] sm:$0xff] 0.0
      %46 = vst [vmem:[#allocation2 + $0xb8] sm:$0xff] 0.0
      %47 = vst [vmem:[#allocation2 + $0xc0] sm:$0xff] 0.0
      %48 = vst [vmem:[#allocation2 + $0xc8] sm:$0xff] 0.0
      %49 = vst [vmem:[#allocation2 + $0xd0] sm:$0xff] 0.0
      %50 = vst [vmem:[#allocation2 + $0xd8] sm:$0xff] 0.0
      %51 = vst [vmem:[#allocation2 + $0xe0] sm:$0xff] 0.0
      %52 = vst [vmem:[#allocation2 + $0xe8] sm:$0xff] 0.0
      %53 = vst [vmem:[#allocation2 + $0xf0] sm:$0xff] 0.0
      %54 = vst [vmem:[#allocation2 + $0xf8] sm:$0xff] 0.0
      %55 = vst [vmem:[#allocation2 + $0x100] sm:$0xff] 0.0
      %56 = vst [vmem:[#allocation2 + $0x108] sm:$0xff] 0.0
      %57 = vst [vmem:[#allocation2 + $0x110] sm:$0xff] 0.0
      %58 = vst [vmem:[#allocation2 + $0x118] sm:$0xff] 0.0
      %59 = vst [vmem:[#allocation2 + $0x120] sm:$0xff] 0.0
      %60 = vst [vmem:[#allocation2 + $0x128] sm:$0xff] 0.0
      %61 = vst [vmem:[#allocation2 + $0x130] sm:$0xff] 0.0
      %62 = vst [vmem:[#allocation2 + $0x138] sm:$0xff] 0.0
      %63 = vst [vmem:[#allocation2 + $0x140] sm:$0xff] 0.0
      %64 = vst [vmem:[#allocation2 + $0x148] sm:$0xff] 0.0
      %65 = vst [vmem:[#allocation2 + $0x150] sm:$0xff] 0.0
      %66 = vst [vmem:[#allocation2 + $0x158] sm:$0xff] 0.0
      %67 = vst [vmem:[#allocation2 + $0x160] sm:$0xff] 0.0
      %68 = vst [vmem:[#allocation2 + $0x168] sm:$0xff] 0.0
      %69 = vst [vmem:[#allocation2 + $0x170] sm:$0xff] 0.0
      %70 = vst [vmem:[#allocation2 + $0x178] sm:$0xff] 0.0
      %71 = vst [vmem:[#allocation2 + $0x180] sm:$0xff] 0.0
      %72 = vst [vmem:[#allocation2 + $0x188] sm:$0xff] 0.0
      %73 = vst [vmem:[#allocation2 + $0x190] sm:$0xff] 0.0
      %74 = vst [vmem:[#allocation2 + $0x198] sm:$0xff] 0.0
      %75 = vst [vmem:[#allocation2 + $0x1a0] sm:$0xff] 0.0
      %76 = vst [vmem:[#allocation2 + $0x1a8] sm:$0xff] 0.0
      %77 = vst [vmem:[#allocation2 + $0x1b0] sm:$0xff] 0.0
      %78 = vst [vmem:[#allocation2 + $0x1b8] sm:$0xff] 0.0
      %79 = vst [vmem:[#allocation2 + $0x1c0] sm:$0xff] 0.0
      %80 = vst [vmem:[#allocation2 + $0x1c8] sm:$0xff] 0.0
      %81 = vst [vmem:[#allocation2 + $0x1d0] sm:$0xff] 0.0
      %82 = vst [vmem:[#allocation2 + $0x1d8] sm:$0xff] 0.0
      %83 = vst [vmem:[#allocation2 + $0x1e0] sm:$0xff] 0.0
      %84 = vst [vmem:[#allocation2 + $0x1e8] sm:$0xff] 0.0
      %85 = vst [vmem:[#allocation2 + $0x1f0] sm:$0xff] 0.0
      %86 = vst [vmem:[#allocation2 + $0x1f8] sm:$0xff] 0.0
    $region21: #{tpu_custom_call.1} parent=1 // pred_fallthru
      _
    %v87 = vld [vmem:[#allocation2] sm:$0xff]
    %v88 = vld [vmem:[#allocation2 + $0x8] sm:$0xff]
    %v89 = vld [vmem:[#allocation2 + $0x10] sm:$0xff]
    %v90 = vld [vmem:[#allocation2 + $0x18] sm:$0xff]
    %v91 = vld [vmem:[#allocation2 + $0x20] sm:$0xff]
    %v92 = vld [vmem:[#allocation2 + $0x28] sm:$0xff]
    %v93 = vld [vmem:[#allocation2 + $0x30] sm:$0xff]
    %v94 = vld [vmem:[#allocation2 + $0x38] sm:$0xff]
    %v95 = vld [vmem:[#allocation2 + $0x40] sm:$0xff]
    %v96 = vld [vmem:[#allocation2 + $0x48] sm:$0xff]
    %v97 = vld [vmem:[#allocation2 + $0x50] sm:$0xff]
    %v98 = vld [vmem:[#allocation2 + $0x58] sm:$0xff]
    %v99 = vld [vmem:[#allocation2 + $0x60] sm:$0xff]
    %v100 = vld [vmem:[#allocation2 + $0x68] sm:$0xff]
    %v101 = vld [vmem:[#allocation2 + $0x70] sm:$0xff]
    %v102 = vld [vmem:[#allocation2 + $0x78] sm:$0xff]
    %v103 = vld [vmem:[#allocation2 + $0x80] sm:$0xff]
    %v104 = vld [vmem:[#allocation2 + $0x88] sm:$0xff]
    %v105 = vld [vmem:[#allocation2 + $0x90] sm:$0xff]
    %v106 = vld [vmem:[#allocation2 + $0x98] sm:$0xff]
    %v107 = vld [vmem:[#allocation2 + $0xa0] sm:$0xff]
    %v108 = vld [vmem:[#allocation2 + $0xa8] sm:$0xff]
    %v109 = vld [vmem:[#allocation2 + $0xb0] sm:$0xff]
    %v110 = vld [vmem:[#allocation2 + $0xb8] sm:$0xff]
    %v111 = vld [vmem:[#allocation2 + $0xc0] sm:$0xff]
    %v112 = vld [vmem:[#allocation2 + $0xc8] sm:$0xff]
    %v113 = vld [vmem:[#allocation2 + $0xd0] sm:$0xff]
    %v114 = vld [vmem:[#allocation2 + $0xd8] sm:$0xff]
    %v115 = vld [vmem:[#allocation2 + $0xe0] sm:$0xff]
    %v116 = vld [vmem:[#allocation2 + $0xe8] sm:$0xff]
    %v117 = vld [vmem:[#allocation2 + $0xf0] sm:$0xff]
    %v118 = vld [vmem:[#allocation2 + $0xf8] sm:$0xff]
    %v119 = vld [vmem:[#allocation2 + $0x100] sm:$0xff]
    %v120 = vld [vmem:[#allocation2 + $0x108] sm:$0xff]
    %v121 = vld [vmem:[#allocation2 + $0x110] sm:$0xff]
    %v122 = vld [vmem:[#allocation2 + $0x118] sm:$0xff]
    %v123 = vld [vmem:[#allocation2 + $0x120] sm:$0xff]
    %v124 = vld [vmem:[#allocation2 + $0x128] sm:$0xff]
    %v125 = vld [vmem:[#allocation2 + $0x130] sm:$0xff]
    %v126 = vld [vmem:[#allocation2 + $0x138] sm:$0xff]
    %v127 = vld [vmem:[#allocation2 + $0x140] sm:$0xff]
    %v128 = vld [vmem:[#allocation2 + $0x148] sm:$0xff]
    %v129 = vld [vmem:[#allocation2 + $0x150] sm:$0xff]
    %v130 = vld [vmem:[#allocation2 + $0x158] sm:$0xff]
    %v131 = vld [vmem:[#allocation2 + $0x160] sm:$0xff]
    %v132 = vld [vmem:[#allocation2 + $0x168] sm:$0xff]
    %v133 = vld [vmem:[#allocation2 + $0x170] sm:$0xff]
    %v134 = vld [vmem:[#allocation2 + $0x178] sm:$0xff]
    %v135 = vld [vmem:[#allocation2 + $0x180] sm:$0xff]
    %v136 = vld [vmem:[#allocation2 + $0x188] sm:$0xff]
    %v137 = vld [vmem:[#allocation2 + $0x190] sm:$0xff]
    %v138 = vld [vmem:[#allocation2 + $0x198] sm:$0xff]
    %v139 = vld [vmem:[#allocation2 + $0x1a0] sm:$0xff]
    %v140 = vld [vmem:[#allocation2 + $0x1a8] sm:$0xff]
    %v141 = vld [vmem:[#allocation2 + $0x1b0] sm:$0xff]
    %v142 = vld [vmem:[#allocation2 + $0x1b8] sm:$0xff]
    %v143 = vld [vmem:[#allocation2 + $0x1c0] sm:$0xff]
    %v144 = vld [vmem:[#allocation2 + $0x1c8] sm:$0xff]
    %v145 = vld [vmem:[#allocation2 + $0x1d0] sm:$0xff]
    %v146 = vld [vmem:[#allocation2 + $0x1d8] sm:$0xff]
    %v147 = vld [vmem:[#allocation2 + $0x1e0] sm:$0xff]
    %v148 = vld [vmem:[#allocation2 + $0x1e8] sm:$0xff]
    %v149 = vld [vmem:[#allocation2 + $0x1f0] sm:$0xff]
    %v150 = vld [vmem:[#allocation2 + $0x1f8] sm:$0xff]
    %v151 = vld [vmem:[%s0] sm:$0xff]
    %v152 = vld [vmem:[%s0 + $0x8] sm:$0xff]
    %v153 = vld [vmem:[%s0 + $0x10] sm:$0xff]
    %v154 = vld [vmem:[%s0 + $0x18] sm:$0xff]
    %v155 = vld [vmem:[%s0 + $0x20] sm:$0xff]
    %v156 = vld [vmem:[%s0 + $0x28] sm:$0xff]
    %v157 = vld [vmem:[%s0 + $0x30] sm:$0xff]
    %v158 = vld [vmem:[%s0 + $0x38] sm:$0xff]
    %v159 = vld [vmem:[%s0 + $0x40] sm:$0xff]
    %v160 = vld [vmem:[%s0 + $0x48] sm:$0xff]
    %v161 = vld [vmem:[%s0 + $0x50] sm:$0xff]
    %v162 = vld [vmem:[%s0 + $0x58] sm:$0xff]
    %v163 = vld [vmem:[%s0 + $0x60] sm:$0xff]
    %v164 = vld [vmem:[%s0 + $0x68] sm:$0xff]
    %v165 = vld [vmem:[%s0 + $0x70] sm:$0xff]
    %v166 = vld [vmem:[%s0 + $0x78] sm:$0xff]
    %v167 = vld [vmem:[%s0 + $0x80] sm:$0xff]
    %v168 = vld [vmem:[%s0 + $0x88] sm:$0xff]
    %v169 = vld [vmem:[%s0 + $0x90] sm:$0xff]
    %v170 = vld [vmem:[%s0 + $0x98] sm:$0xff]
    %v171 = vld [vmem:[%s0 + $0xa0] sm:$0xff]
    %v172 = vld [vmem:[%s0 + $0xa8] sm:$0xff]
    %v173 = vld [vmem:[%s0 + $0xb0] sm:$0xff]
    %v174 = vld [vmem:[%s0 + $0xb8] sm:$0xff]
    %v175 = vld [vmem:[%s0 + $0xc0] sm:$0xff]
    %v176 = vld [vmem:[%s0 + $0xc8] sm:$0xff]
    %v177 = vld [vmem:[%s0 + $0xd0] sm:$0xff]
    %v178 = vld [vmem:[%s0 + $0xd8] sm:$0xff]
    %v179 = vld [vmem:[%s0 + $0xe0] sm:$0xff]
    %v180 = vld [vmem:[%s0 + $0xe8] sm:$0xff]
    %v181 = vld [vmem:[%s0 + $0xf0] sm:$0xff]
    %v182 = vld [vmem:[%s0 + $0xf8] sm:$0xff]
    %v183 = vld [vmem:[%s0 + $0x100] sm:$0xff]
    %v184 = vld [vmem:[%s0 + $0x108] sm:$0xff]
    %v185 = vld [vmem:[%s0 + $0x110] sm:$0xff]
    %v186 = vld [vmem:[%s0 + $0x118] sm:$0xff]
    %v187 = vld [vmem:[%s0 + $0x120] sm:$0xff]
    %v188 = vld [vmem:[%s0 + $0x128] sm:$0xff]
    %v189 = vld [vmem:[%s0 + $0x130] sm:$0xff]
    %v190 = vld [vmem:[%s0 + $0x138] sm:$0xff]
    %v191 = vld [vmem:[%s0 + $0x140] sm:$0xff]
    %v192 = vld [vmem:[%s0 + $0x148] sm:$0xff]
    %v193 = vld [vmem:[%s0 + $0x150] sm:$0xff]
    %v194 = vld [vmem:[%s0 + $0x158] sm:$0xff]
    %v195 = vld [vmem:[%s0 + $0x160] sm:$0xff]
    %v196 = vld [vmem:[%s0 + $0x168] sm:$0xff]
    %v197 = vld [vmem:[%s0 + $0x170] sm:$0xff]
    %v198 = vld [vmem:[%s0 + $0x178] sm:$0xff]
    %v199 = vld [vmem:[%s0 + $0x180] sm:$0xff]
    %v200 = vld [vmem:[%s0 + $0x188] sm:$0xff]
    %v201 = vld [vmem:[%s0 + $0x190] sm:$0xff]
    %v202 = vld [vmem:[%s0 + $0x198] sm:$0xff]
    %v203 = vld [vmem:[%s0 + $0x1a0] sm:$0xff]
    %v204 = vld [vmem:[%s0 + $0x1a8] sm:$0xff]
    %v205 = vld [vmem:[%s0 + $0x1b0] sm:$0xff]
    %v206 = vld [vmem:[%s0 + $0x1b8] sm:$0xff]
    %v207 = vld [vmem:[%s0 + $0x1c0] sm:$0xff]
    %v208 = vld [vmem:[%s0 + $0x1c8] sm:$0xff]
    %v209 = vld [vmem:[%s0 + $0x1d0] sm:$0xff]
    %v210 = vld [vmem:[%s0 + $0x1d8] sm:$0xff]
    %v211 = vld [vmem:[%s0 + $0x1e0] sm:$0xff]
    %v212 = vld [vmem:[%s0 + $0x1e8] sm:$0xff]
    %v213 = vld [vmem:[%s0 + $0x1f0] sm:$0xff]
    %v214 = vld [vmem:[%s0 + $0x1f8] sm:$0xff]
    %v215 = vld [vmem:[%s1] sm:$0xf]
    %v216 = vld [vmem:[%s1 + $0x4] sm:$0xf]
    %v217 = vld [vmem:[%s1 + $0x8] sm:$0xf]
    %v218 = vld [vmem:[%s1 + $0xc] sm:$0xf]
    %v219 = vld [vmem:[%s1 + $0x10] sm:$0xf]
    %v220 = vld [vmem:[%s1 + $0x14] sm:$0xf]
    %v221 = vld [vmem:[%s1 + $0x18] sm:$0xf]
    %v222 = vld [vmem:[%s1 + $0x1c] sm:$0xf]
    %v223 = vld [vmem:[%s1 + $0x20] sm:$0xf]
    %v224 = vld [vmem:[%s1 + $0x24] sm:$0xf]
    %v225 = vld [vmem:[%s1 + $0x28] sm:$0xf]
    %v226 = vld [vmem:[%s1 + $0x2c] sm:$0xf]
    %v227 = vld [vmem:[%s1 + $0x30] sm:$0xf]
    %v228 = vld [vmem:[%s1 + $0x34] sm:$0xf]
    %v229 = vld [vmem:[%s1 + $0x38] sm:$0xf]
    %v230 = vld [vmem:[%s1 + $0x3c] sm:$0xf]
    %v231 = vld [vmem:[%s1 + $0x40] sm:$0xf]
    %v232 = vld [vmem:[%s1 + $0x44] sm:$0xf]
    %v233 = vld [vmem:[%s1 + $0x48] sm:$0x3]
    %v298 = vunpack.c.l.b16 %v151
    %v299 = vunpack.c.h.b16 %v151
    %v300 = vunpack.c.l.b16 %v152
    %v301 = vunpack.c.h.b16 %v152
    %v302 = vunpack.c.l.b16 %v153
    %v303 = vunpack.c.h.b16 %v153
    %v304 = vunpack.c.l.b16 %v154
    %v305 = vunpack.c.h.b16 %v154
    %v306 = vunpack.c.l.b16 %v155
    %v307 = vunpack.c.h.b16 %v155
    %v308 = vunpack.c.l.b16 %v156
    %v309 = vunpack.c.h.b16 %v156
    %v310 = vunpack.c.l.b16 %v157
    %v311 = vunpack.c.h.b16 %v157
    %v312 = vunpack.c.l.b16 %v158
    %v313 = vunpack.c.h.b16 %v158
    %v314 = vunpack.c.l.b16 %v159
    %v315 = vunpack.c.h.b16 %v159
    %v316 = vunpack.c.l.b16 %v160
    %v317 = vunpack.c.h.b16 %v160
    %v318 = vunpack.c.l.b16 %v161
    %v319 = vunpack.c.h.b16 %v161
    %v320 = vunpack.c.l.b16 %v162
    %v321 = vunpack.c.h.b16 %v162
    %v322 = vunpack.c.l.b16 %v163
    %v323 = vunpack.c.h.b16 %v163
    %v324 = vunpack.c.l.b16 %v164
    %v325 = vunpack.c.h.b16 %v164
    %v326 = vunpack.c.l.b16 %v165
    %v327 = vunpack.c.h.b16 %v165
    %v328 = vunpack.c.l.b16 %v166
    %v329 = vunpack.c.h.b16 %v166
    %v330 = vunpack.c.l.b16 %v167
    %v331 = vunpack.c.h.b16 %v167
    %v332 = vunpack.c.l.b16 %v168
    %v333 = vunpack.c.h.b16 %v168
    %v334 = vunpack.c.l.b16 %v169
    %v335 = vunpack.c.h.b16 %v169
    %v336 = vunpack.c.l.b16 %v170
    %v337 = vunpack.c.h.b16 %v170
    %v338 = vunpack.c.l.b16 %v171
    %v339 = vunpack.c.h.b16 %v171
    %v340 = vunpack.c.l.b16 %v172
    %v341 = vunpack.c.h.b16 %v172
    %v342 = vunpack.c.l.b16 %v173
    %v343 = vunpack.c.h.b16 %v173
    %v344 = vunpack.c.l.b16 %v174
    %v345 = vunpack.c.h.b16 %v174
    %v346 = vunpack.c.l.b16 %v175
    %v347 = vunpack.c.h.b16 %v175
    %v348 = vunpack.c.l.b16 %v176
    %v349 = vunpack.c.h.b16 %v176
    %v350 = vunpack.c.l.b16 %v177
    %v351 = vunpack.c.h.b16 %v177
    %v352 = vunpack.c.l.b16 %v178
    %v353 = vunpack.c.h.b16 %v178
    %v354 = vunpack.c.l.b16 %v179
    %v355 = vunpack.c.h.b16 %v179
    %v356 = vunpack.c.l.b16 %v180
    %v357 = vunpack.c.h.b16 %v180
    %v358 = vunpack.c.l.b16 %v181
    %v359 = vunpack.c.h.b16 %v181
    %v360 = vunpack.c.l.b16 %v182
    %v361 = vunpack.c.h.b16 %v182
    %v362 = vunpack.c.l.b16 %v183
    %v363 = vunpack.c.h.b16 %v183
    %v364 = vunpack.c.l.b16 %v184
    %v365 = vunpack.c.h.b16 %v184
    %v366 = vunpack.c.l.b16 %v185
    %v367 = vunpack.c.h.b16 %v185
    %v368 = vunpack.c.l.b16 %v186
    %v369 = vunpack.c.h.b16 %v186
    %v370 = vunpack.c.l.b16 %v187
    %v371 = vunpack.c.h.b16 %v187
    %v372 = vunpack.c.l.b16 %v188
    %v373 = vunpack.c.h.b16 %v188
    %v374 = vunpack.c.l.b16 %v189
    %v375 = vunpack.c.h.b16 %v189
    %v376 = vunpack.c.l.b16 %v190
    %v377 = vunpack.c.h.b16 %v190
    %v378 = vunpack.c.l.b16 %v191
    %v379 = vunpack.c.h.b16 %v191
    %v380 = vunpack.c.l.b16 %v192
    %v381 = vunpack.c.h.b16 %v192
    %v382 = vunpack.c.l.b16 %v193
    %v383 = vunpack.c.h.b16 %v193
    %v384 = vunpack.c.l.b16 %v194
    %v385 = vunpack.c.h.b16 %v194
    %v386 = vunpack.c.l.b16 %v195
    %v387 = vunpack.c.h.b16 %v195
    %v388 = vunpack.c.l.b16 %v196
    %v389 = vunpack.c.h.b16 %v196
    %v390 = vunpack.c.l.b16 %v197
    %v391 = vunpack.c.h.b16 %v197
    %v392 = vunpack.c.l.b16 %v198
    %v393 = vunpack.c.h.b16 %v198
    %v394 = vunpack.c.l.b16 %v199
    %v395 = vunpack.c.h.b16 %v199
    %v396 = vunpack.c.l.b16 %v200
    %v397 = vunpack.c.h.b16 %v200
    %v398 = vunpack.c.l.b16 %v201
    %v399 = vunpack.c.h.b16 %v201
    %v400 = vunpack.c.l.b16 %v202
    %v401 = vunpack.c.h.b16 %v202
    %v402 = vunpack.c.l.b16 %v203
    %v403 = vunpack.c.h.b16 %v203
    %v404 = vunpack.c.l.b16 %v204
    %v405 = vunpack.c.h.b16 %v204
    %v406 = vunpack.c.l.b16 %v205
    %v407 = vunpack.c.h.b16 %v205
    %v408 = vunpack.c.l.b16 %v206
    %v409 = vunpack.c.h.b16 %v206
    %v410 = vunpack.c.l.b16 %v207
    %v411 = vunpack.c.h.b16 %v207
    %v412 = vunpack.c.l.b16 %v208
    %v413 = vunpack.c.h.b16 %v208
    %v414 = vunpack.c.l.b16 %v209
    %v415 = vunpack.c.h.b16 %v209
    %v416 = vunpack.c.l.b16 %v210
    %v417 = vunpack.c.h.b16 %v210
    %v418 = vunpack.c.l.b16 %v211
    %v419 = vunpack.c.h.b16 %v211
    %v420 = vunpack.c.l.b16 %v212
    %v421 = vunpack.c.h.b16 %v212
    %v422 = vunpack.c.l.b16 %v213
    %v423 = vunpack.c.h.b16 %v213
    %v424 = vunpack.c.l.b16 %v214
    %v425 = vunpack.c.h.b16 %v214
    %v426 = vpack.c.b16 %v300, %v298
    %v427 = vpack.c.b16 %v301, %v299
    %v428 = vpack.c.b16 %v304, %v302
    %v429 = vpack.c.b16 %v305, %v303
    %v430 = vpack.c.b16 %v308, %v306
    %v431 = vpack.c.b16 %v309, %v307
    %v432 = vpack.c.b16 %v312, %v310
    %v433 = vpack.c.b16 %v313, %v311
    %v434 = vpack.c.b16 %v316, %v314
    %v435 = vpack.c.b16 %v317, %v315
    %v436 = vpack.c.b16 %v320, %v318
    %v437 = vpack.c.b16 %v321, %v319
    %v438 = vpack.c.b16 %v324, %v322
    %v439 = vpack.c.b16 %v325, %v323
    %v440 = vpack.c.b16 %v328, %v326
    %v441 = vpack.c.b16 %v329, %v327
    %v442 = vpack.c.b16 %v332, %v330
    %v443 = vpack.c.b16 %v333, %v331
    %v444 = vpack.c.b16 %v336, %v334
    %v445 = vpack.c.b16 %v337, %v335
    %v446 = vpack.c.b16 %v340, %v338
    %v447 = vpack.c.b16 %v341, %v339
    %v448 = vpack.c.b16 %v344, %v342
    %v449 = vpack.c.b16 %v345, %v343
    %v450 = vpack.c.b16 %v348, %v346
    %v451 = vpack.c.b16 %v349, %v347
    %v452 = vpack.c.b16 %v352, %v350
    %v453 = vpack.c.b16 %v353, %v351
    %v454 = vpack.c.b16 %v356, %v354
    %v455 = vpack.c.b16 %v357, %v355
    %v456 = vpack.c.b16 %v360, %v358
    %v457 = vpack.c.b16 %v361, %v359
    %v458 = vpack.c.b16 %v364, %v362
    %v459 = vpack.c.b16 %v365, %v363
    %v460 = vpack.c.b16 %v368, %v366
    %v461 = vpack.c.b16 %v369, %v367
    %v462 = vpack.c.b16 %v372, %v370
    %v463 = vpack.c.b16 %v373, %v371
    %v464 = vpack.c.b16 %v376, %v374
    %v465 = vpack.c.b16 %v377, %v375
    %v466 = vpack.c.b16 %v380, %v378
    %v467 = vpack.c.b16 %v381, %v379
    %v468 = vpack.c.b16 %v384, %v382
    %v469 = vpack.c.b16 %v385, %v383
    %v470 = vpack.c.b16 %v388, %v386
    %v471 = vpack.c.b16 %v389, %v387
    %v472 = vpack.c.b16 %v392, %v390
    %v473 = vpack.c.b16 %v393, %v391
    %v474 = vpack.c.b16 %v396, %v394
    %v475 = vpack.c.b16 %v397, %v395
    %v476 = vpack.c.b16 %v400, %v398
    %v477 = vpack.c.b16 %v401, %v399
    %v478 = vpack.c.b16 %v404, %v402
    %v479 = vpack.c.b16 %v405, %v403
    %v480 = vpack.c.b16 %v408, %v406
    %v481 = vpack.c.b16 %v409, %v407
    %v482 = vpack.c.b16 %v412, %v410
    %v483 = vpack.c.b16 %v413, %v411
    %v484 = vpack.c.b16 %v416, %v414
    %v485 = vpack.c.b16 %v417, %v415
    %v486 = vpack.c.b16 %v420, %v418
    %v487 = vpack.c.b16 %v421, %v419
    %v488 = vpack.c.b16 %v424, %v422
    %v489 = vpack.c.b16 %v425, %v423
    %v541 = vunpack.c.l.b16 %v215
    %v542 = vunpack.c.l.b16 %v216
    %v543 = vunpack.c.l.b16 %v217
    %v544 = vunpack.c.l.b16 %v218
    %v545 = vunpack.c.l.b16 %v219
    %v546 = vunpack.c.l.b16 %v220
    %v547 = vunpack.c.l.b16 %v221
    %v548 = vunpack.c.l.b16 %v222
    %v549 = vunpack.c.l.b16 %v223
    %v550 = vunpack.c.l.b16 %v224
    %v551 = vunpack.c.l.b16 %v225
    %v552 = vunpack.c.l.b16 %v226
    %v553 = vunpack.c.l.b16 %v227
    %v554 = vunpack.c.l.b16 %v228
    %v555 = vunpack.c.l.b16 %v229
    %v556 = vunpack.c.l.b16 %v230
    %v557 = vunpack.c.l.b16 %v231
    %v558 = vunpack.c.l.b16 %v232
    %v559 = vunpack.c.l.b16 %v233
    %v560 = vpack.c.b16 %v542, %v541
    %v561 = vpack.c.b16 %v544, %v543
    %v562 = vpack.c.b16 %v546, %v545
    %v563 = vpack.c.b16 %v548, %v547
    %v564 = vpack.c.b16 %v550, %v549
    %v565 = vpack.c.b16 %v552, %v551
    %v566 = vpack.c.b16 %v554, %v553
    %v567 = vpack.c.b16 %v556, %v555
    %v568 = vpack.c.b16 %v558, %v557
    %v569 = vpack.c.b16 %v559, %v559
    %vm579 = vcmask 154624
    %v581 = vsel %vm579, %v427, 0
    %v584 = vsel %vm579, %v429, 0
    %v587 = vsel %vm579, %v431, 0
    %v590 = vsel %vm579, %v433, 0
    %v593 = vsel %vm579, %v435, 0
    %v596 = vsel %vm579, %v437, 0
    %v599 = vsel %vm579, %v439, 0
    %v602 = vsel %vm579, %v441, 0
    %v605 = vsel %vm579, %v443, 0
    %v608 = vsel %vm579, %v445, 0
    %v611 = vsel %vm579, %v447, 0
    %v614 = vsel %vm579, %v449, 0
    %v617 = vsel %vm579, %v451, 0
    %v620 = vsel %vm579, %v453, 0
    %v623 = vsel %vm579, %v455, 0
    %v626 = vsel %vm579, %v457, 0
    %v629 = vsel %vm579, %v459, 0
    %v632 = vsel %vm579, %v461, 0
    %v635 = vsel %vm579, %v463, 0
    %v638 = vsel %vm579, %v465, 0
    %v641 = vsel %vm579, %v467, 0
    %v644 = vsel %vm579, %v469, 0
    %v647 = vsel %vm579, %v471, 0
    %v650 = vsel %vm579, %v473, 0
    %v653 = vsel %vm579, %v475, 0
    %v656 = vsel %vm579, %v477, 0
    %v659 = vsel %vm579, %v479, 0
    %v662 = vsel %vm579, %v481, 0
    %v665 = vsel %vm579, %v483, 0
    %v668 = vsel %vm579, %v485, 0
    %v671 = vsel %vm579, %v487, 0
    %v674 = vsel %vm579, %v489, 0
    %vm676 = vcmask 1040384
    %vm677 = vcmask 1041408
    %v678 = vsel %vm676, 4294967295, 65535
    %v679 = vsel %vm677, %v678, 0
    %v681 = vand.u32 %v569, %v679
    %683 = vmatprep.subr.bf16.mxu0 0
    %684 = vmatpush1.bf16.msra.mxu0 %v567
    %685 = vmatprep.subr.bf16.mxu0 0
    %686 = vmatpush1.bf16.msra.mxu0 %v566
    %687 = vmatprep.subr.bf16.mxu0 0
    %688 = vmatpush1.bf16.msra.mxu0 %v565
    %689 = vmatprep.subr.bf16.mxu0 0
    %690 = vmatpush1.bf16.msra.mxu0 %v564
    %691 = vmatprep.subr.bf16.mxu0 0
    %692 = vmatpush1.bf16.msra.mxu0 %v563
    %693 = vmatprep.subr.bf16.mxu0 0
    %694 = vmatpush1.bf16.msra.mxu0 %v562
    %695 = vmatprep.subr.bf16.mxu0 0
    %696 = vmatpush1.bf16.msra.mxu0 %v561
    %697 = vmatprep.subr.bf16.mxu0 0
    %698 = vmatpush1.bf16.msra.mxu0 %v560
    %699 = vmatprep.subr.bf16.mxu0 0
    %700 = vmatpush2.bf16.msra.mxu0 0
    %701 = vmatprep.subr.bf16.mxu0 0
    %702 = vmatpush2.bf16.msra.mxu0 0
    %703 = vmatprep.subr.bf16.mxu0 0
    %704 = vmatpush2.bf16.msra.mxu0 0
    %705 = vmatprep.subr.bf16.mxu0 0
    %706 = vmatpush2.bf16.msra.mxu0 0
    %707 = vmatprep.subr.bf16.mxu0 0
    %708 = vmatpush2.bf16.msra.mxu0 0
    %709 = vmatprep.subr.bf16.mxu0 0
    %710 = vmatpush2.bf16.msra.mxu0 0
    %711 = vmatprep.subr.bf16.mxu0 0
    %712 = vmatpush2.bf16.msra.mxu0 %v681
    %713 = vmatprep.subr.bf16.mxu0 0
    %714 = vmatpush2.bf16.msra.mxu0 %v568
    %715 = vmatprep.mubr.bf16.mxu0 %v581
    %716 = vmatmul.mubr.bf16.gmra.mxu0 %v426
    %v717 = vpop.f32.mrf.mxu0
    %v718 = vadd.f32 0.0, %v717
    %v719 = vpop.f32.mrf.mxu0
    %v720 = vpop.f32.mrf.mxu0
    %v721 = vadd.f32 0.0, %v720
    %v722 = vpop.f32.mrf.mxu0
    %723 = vmatprep.mubr.bf16.mxu0 %v584
    %724 = vmatmul.mubr.bf16.gmra.mxu0 %v428
    %v725 = vpop.f32.mrf.mxu0
    %v726 = vadd.f32 0.0, %v725
    %v727 = vpop.f32.mrf.mxu0
    %v728 = vpop.f32.mrf.mxu0
    %v729 = vadd.f32 0.0, %v728
    %v730 = vpop.f32.mrf.mxu0
    %731 = vmatprep.mubr.bf16.mxu0 %v587
    %732 = vmatmul.mubr.bf16.gmra.mxu0 %v430
    %v733 = vpop.f32.mrf.mxu0
    %v734 = vadd.f32 0.0, %v733
    %v735 = vpop.f32.mrf.mxu0
    %v736 = vpop.f32.mrf.mxu0
    %v737 = vadd.f32 0.0, %v736
    %v738 = vpop.f32.mrf.mxu0
    %739 = vmatprep.mubr.bf16.mxu0 %v590
    %740 = vmatmul.mubr.bf16.gmra.mxu0 %v432
    %v741 = vpop.f32.mrf.mxu0
    %v742 = vadd.f32 0.0, %v741
    %v743 = vpop.f32.mrf.mxu0
    %v744 = vpop.f32.mrf.mxu0
    %v745 = vadd.f32 0.0, %v744
    %v746 = vpop.f32.mrf.mxu0
    %747 = vmatprep.mubr.bf16.mxu0 %v593
    %748 = vmatmul.mubr.bf16.gmra.mxu0 %v434
    %v749 = vpop.f32.mrf.mxu0
    %v750 = vadd.f32 0.0, %v749
    %v751 = vpop.f32.mrf.mxu0
    %v752 = vpop.f32.mrf.mxu0
    %v753 = vadd.f32 0.0, %v752
    %v754 = vpop.f32.mrf.mxu0
    %755 = vmatprep.mubr.bf16.mxu0 %v596
    %756 = vmatmul.mubr.bf16.gmra.mxu0 %v436
    %v757 = vpop.f32.mrf.mxu0
    %v758 = vadd.f32 0.0, %v757
    %v759 = vpop.f32.mrf.mxu0
    %v760 = vpop.f32.mrf.mxu0
    %v761 = vadd.f32 0.0, %v760
    %v762 = vpop.f32.mrf.mxu0
    %763 = vmatprep.mubr.bf16.mxu0 %v599
    %764 = vmatmul.mubr.bf16.gmra.mxu0 %v438
    %v765 = vpop.f32.mrf.mxu0
    %v766 = vadd.f32 0.0, %v765
    %v767 = vpop.f32.mrf.mxu0
    %v768 = vpop.f32.mrf.mxu0
    %v769 = vadd.f32 0.0, %v768
    %v770 = vpop.f32.mrf.mxu0
    %771 = vmatprep.mubr.bf16.mxu0 %v602
    %772 = vmatmul.mubr.bf16.gmra.mxu0 %v440
    %v773 = vpop.f32.mrf.mxu0
    %v774 = vadd.f32 0.0, %v773
    %v775 = vpop.f32.mrf.mxu0
    %v776 = vpop.f32.mrf.mxu0
    %v777 = vadd.f32 0.0, %v776
    %v778 = vpop.f32.mrf.mxu0
    %779 = vmatprep.mubr.bf16.mxu0 %v605
    %780 = vmatmul.mubr.bf16.gmra.mxu0 %v442
    %v781 = vpop.f32.mrf.mxu0
    %v782 = vadd.f32 0.0, %v781
    %v783 = vpop.f32.mrf.mxu0
    %v784 = vpop.f32.mrf.mxu0
    %v785 = vadd.f32 0.0, %v784
    %v786 = vpop.f32.mrf.mxu0
    %787 = vmatprep.mubr.bf16.mxu0 %v608
    %788 = vmatmul.mubr.bf16.gmra.mxu0 %v444
    %v789 = vpop.f32.mrf.mxu0
    %v790 = vadd.f32 0.0, %v789
    %v791 = vpop.f32.mrf.mxu0
    %v792 = vpop.f32.mrf.mxu0
    %v793 = vadd.f32 0.0, %v792
    %v794 = vpop.f32.mrf.mxu0
    %795 = vmatprep.mubr.bf16.mxu0 %v611
    %796 = vmatmul.mubr.bf16.gmra.mxu0 %v446
    %v797 = vpop.f32.mrf.mxu0
    %v798 = vadd.f32 0.0, %v797
    %v799 = vpop.f32.mrf.mxu0
    %v800 = vpop.f32.mrf.mxu0
    %v801 = vadd.f32 0.0, %v800
    %v802 = vpop.f32.mrf.mxu0
    %803 = vmatprep.mubr.bf16.mxu0 %v614
    %804 = vmatmul.mubr.bf16.gmra.mxu0 %v448
    %v805 = vpop.f32.mrf.mxu0
    %v806 = vadd.f32 0.0, %v805
    %v807 = vpop.f32.mrf.mxu0
    %v808 = vpop.f32.mrf.mxu0
    %v809 = vadd.f32 0.0, %v808
    %v810 = vpop.f32.mrf.mxu0
    %811 = vmatprep.mubr.bf16.mxu0 %v617
    %812 = vmatmul.mubr.bf16.gmra.mxu0 %v450
    %v813 = vpop.f32.mrf.mxu0
    %v814 = vadd.f32 0.0, %v813
    %v815 = vpop.f32.mrf.mxu0
    %v816 = vpop.f32.mrf.mxu0
    %v817 = vadd.f32 0.0, %v816
    %v818 = vpop.f32.mrf.mxu0
    %819 = vmatprep.mubr.bf16.mxu0 %v620
    %820 = vmatmul.mubr.bf16.gmra.mxu0 %v452
    %v821 = vpop.f32.mrf.mxu0
    %v822 = vadd.f32 0.0, %v821
    %v823 = vpop.f32.mrf.mxu0
    %v824 = vpop.f32.mrf.mxu0
    %v825 = vadd.f32 0.0, %v824
    %v826 = vpop.f32.mrf.mxu0
    %827 = vmatprep.mubr.bf16.mxu0 %v623
    %828 = vmatmul.mubr.bf16.gmra.mxu0 %v454
    %v829 = vpop.f32.mrf.mxu0
    %v830 = vadd.f32 0.0, %v829
    %v831 = vpop.f32.mrf.mxu0
    %v832 = vpop.f32.mrf.mxu0
    %v833 = vadd.f32 0.0, %v832
    %v834 = vpop.f32.mrf.mxu0
    %835 = vmatprep.mubr.bf16.mxu0 %v626
    %836 = vmatmul.mubr.bf16.gmra.mxu0 %v456
    %v837 = vpop.f32.mrf.mxu0
    %v838 = vadd.f32 0.0, %v837
    %v839 = vpop.f32.mrf.mxu0
    %v840 = vpop.f32.mrf.mxu0
    %v841 = vadd.f32 0.0, %v840
    %v842 = vpop.f32.mrf.mxu0
    %843 = vmatprep.mubr.bf16.mxu0 %v629
    %844 = vmatmul.mubr.bf16.gmra.mxu0 %v458
    %v845 = vpop.f32.mrf.mxu0
    %v846 = vadd.f32 0.0, %v845
    %v847 = vpop.f32.mrf.mxu0
    %v848 = vpop.f32.mrf.mxu0
    %v849 = vadd.f32 0.0, %v848
    %v850 = vpop.f32.mrf.mxu0
    %851 = vmatprep.mubr.bf16.mxu0 %v632
    %852 = vmatmul.mubr.bf16.gmra.mxu0 %v460
    %v853 = vpop.f32.mrf.mxu0
    %v854 = vadd.f32 0.0, %v853
    %v855 = vpop.f32.mrf.mxu0
    %v856 = vpop.f32.mrf.mxu0
    %v857 = vadd.f32 0.0, %v856
    %v858 = vpop.f32.mrf.mxu0
    %859 = vmatprep.mubr.bf16.mxu0 %v635
    %860 = vmatmul.mubr.bf16.gmra.mxu0 %v462
    %v861 = vpop.f32.mrf.mxu0
    %v862 = vadd.f32 0.0, %v861
    %v863 = vpop.f32.mrf.mxu0
    %v864 = vpop.f32.mrf.mxu0
    %v865 = vadd.f32 0.0, %v864
    %v866 = vpop.f32.mrf.mxu0
    %867 = vmatprep.mubr.bf16.mxu0 %v638
    %868 = vmatmul.mubr.bf16.gmra.mxu0 %v464
    %v869 = vpop.f32.mrf.mxu0
    %v870 = vadd.f32 0.0, %v869
    %v871 = vpop.f32.mrf.mxu0
    %v872 = vpop.f32.mrf.mxu0
    %v873 = vadd.f32 0.0, %v872
    %v874 = vpop.f32.mrf.mxu0
    %875 = vmatprep.mubr.bf16.mxu0 %v641
    %876 = vmatmul.mubr.bf16.gmra.mxu0 %v466
    %v877 = vpop.f32.mrf.mxu0
    %v878 = vadd.f32 0.0, %v877
    %v879 = vpop.f32.mrf.mxu0
    %v880 = vpop.f32.mrf.mxu0
    %v881 = vadd.f32 0.0, %v880
    %v882 = vpop.f32.mrf.mxu0
    %883 = vmatprep.mubr.bf16.mxu0 %v644
    %884 = vmatmul.mubr.bf16.gmra.mxu0 %v468
    %v885 = vpop.f32.mrf.mxu0
    %v886 = vadd.f32 0.0, %v885
    %v887 = vpop.f32.mrf.mxu0
    %v888 = vpop.f32.mrf.mxu0
    %v889 = vadd.f32 0.0, %v888
    %v890 = vpop.f32.mrf.mxu0
    %891 = vmatprep.mubr.bf16.mxu0 %v647
    %892 = vmatmul.mubr.bf16.gmra.mxu0 %v470
    %v893 = vpop.f32.mrf.mxu0
    %v894 = vadd.f32 0.0, %v893
    %v895 = vpop.f32.mrf.mxu0
    %v896 = vpop.f32.mrf.mxu0
    %v897 = vadd.f32 0.0, %v896
    %v898 = vpop.f32.mrf.mxu0
    %899 = vmatprep.mubr.bf16.mxu0 %v650
    %900 = vmatmul.mubr.bf16.gmra.mxu0 %v472
    %v901 = vpop.f32.mrf.mxu0
    %v902 = vadd.f32 0.0, %v901
    %v903 = vpop.f32.mrf.mxu0
    %v904 = vpop.f32.mrf.mxu0
    %v905 = vadd.f32 0.0, %v904
    %v906 = vpop.f32.mrf.mxu0
    %907 = vmatprep.mubr.bf16.mxu0 %v653
    %908 = vmatmul.mubr.bf16.gmra.mxu0 %v474
    %v909 = vpop.f32.mrf.mxu0
    %v910 = vadd.f32 0.0, %v909
    %v911 = vpop.f32.mrf.mxu0
    %v912 = vpop.f32.mrf.mxu0
    %v913 = vadd.f32 0.0, %v912
    %v914 = vpop.f32.mrf.mxu0
    %915 = vmatprep.mubr.bf16.mxu0 %v656
    %916 = vmatmul.mubr.bf16.gmra.mxu0 %v476
    %v917 = vpop.f32.mrf.mxu0
    %v918 = vadd.f32 0.0, %v917
    %v919 = vpop.f32.mrf.mxu0
    %v920 = vpop.f32.mrf.mxu0
    %v921 = vadd.f32 0.0, %v920
    %v922 = vpop.f32.mrf.mxu0
    %923 = vmatprep.mubr.bf16.mxu0 %v659
    %924 = vmatmul.mubr.bf16.gmra.mxu0 %v478
    %v925 = vpop.f32.mrf.mxu0
    %v926 = vadd.f32 0.0, %v925
    %v927 = vpop.f32.mrf.mxu0
    %v928 = vpop.f32.mrf.mxu0
    %v929 = vadd.f32 0.0, %v928
    %v930 = vpop.f32.mrf.mxu0
    %931 = vmatprep.mubr.bf16.mxu0 %v662
    %932 = vmatmul.mubr.bf16.gmra.mxu0 %v480
    %v933 = vpop.f32.mrf.mxu0
    %v934 = vadd.f32 0.0, %v933
    %v935 = vpop.f32.mrf.mxu0
    %v936 = vpop.f32.mrf.mxu0
    %v937 = vadd.f32 0.0, %v936
    %v938 = vpop.f32.mrf.mxu0
    %939 = vmatprep.mubr.bf16.mxu0 %v665
    %940 = vmatmul.mubr.bf16.gmra.mxu0 %v482
    %v941 = vpop.f32.mrf.mxu0
    %v942 = vadd.f32 0.0, %v941
    %v943 = vpop.f32.mrf.mxu0
    %v944 = vpop.f32.mrf.mxu0
    %v945 = vadd.f32 0.0, %v944
    %v946 = vpop.f32.mrf.mxu0
    %947 = vmatprep.mubr.bf16.mxu0 %v668
    %948 = vmatmul.mubr.bf16.gmra.mxu0 %v484
    %v949 = vpop.f32.mrf.mxu0
    %v950 = vadd.f32 0.0, %v949
    %v951 = vpop.f32.mrf.mxu0
    %v952 = vpop.f32.mrf.mxu0
    %v953 = vadd.f32 0.0, %v952
    %v954 = vpop.f32.mrf.mxu0
    %955 = vmatprep.mubr.bf16.mxu0 %v671
    %956 = vmatmul.mubr.bf16.gmra.mxu0 %v486
    %v957 = vpop.f32.mrf.mxu0
    %v958 = vadd.f32 0.0, %v957
    %v959 = vpop.f32.mrf.mxu0
    %v960 = vpop.f32.mrf.mxu0
    %v961 = vadd.f32 0.0, %v960
    %v962 = vpop.f32.mrf.mxu0
    %963 = vmatprep.mubr.bf16.mxu0 %v674
    %964 = vmatmul.mubr.bf16.gmra.mxu0 %v488
    %v965 = vpop.f32.mrf.mxu0
    %v966 = vadd.f32 0.0, %v965
    %v967 = vpop.f32.mrf.mxu0
    %v968 = vpop.f32.mrf.mxu0
    %v969 = vadd.f32 0.0, %v968
    %v970 = vpop.f32.mrf.mxu0
    %971 = vdwg.mxu0
    %v972 = vadd.f32 %v87, %v718
    %v973 = vadd.f32 %v88, %v721
    %v974 = vadd.f32 %v89, %v726
    %v975 = vadd.f32 %v90, %v729
    %v976 = vadd.f32 %v91, %v734
    %v977 = vadd.f32 %v92, %v737
    %v978 = vadd.f32 %v93, %v742
    %v979 = vadd.f32 %v94, %v745
    %v980 = vadd.f32 %v95, %v750
    %v981 = vadd.f32 %v96, %v753
    %v982 = vadd.f32 %v97, %v758
    %v983 = vadd.f32 %v98, %v761
    %v984 = vadd.f32 %v99, %v766
    %v985 = vadd.f32 %v100, %v769
    %v986 = vadd.f32 %v101, %v774
    %v987 = vadd.f32 %v102, %v777
    %v988 = vadd.f32 %v103, %v782
    %v989 = vadd.f32 %v104, %v785
    %v990 = vadd.f32 %v105, %v790
    %v991 = vadd.f32 %v106, %v793
    %v992 = vadd.f32 %v107, %v798
    %v993 = vadd.f32 %v108, %v801
    %v994 = vadd.f32 %v109, %v806
    %v995 = vadd.f32 %v110, %v809
    %v996 = vadd.f32 %v111, %v814
    %v997 = vadd.f32 %v112, %v817
    %v998 = vadd.f32 %v113, %v822
    %v999 = vadd.f32 %v114, %v825
    %v1000 = vadd.f32 %v115, %v830
    %v1001 = vadd.f32 %v116, %v833
    %v1002 = vadd.f32 %v117, %v838
    %v1003 = vadd.f32 %v118, %v841
    %v1004 = vadd.f32 %v119, %v846
    %v1005 = vadd.f32 %v120, %v849
    %v1006 = vadd.f32 %v121, %v854
    %v1007 = vadd.f32 %v122, %v857
    %v1008 = vadd.f32 %v123, %v862
    %v1009 = vadd.f32 %v124, %v865
    %v1010 = vadd.f32 %v125, %v870
    %v1011 = vadd.f32 %v126, %v873
    %v1012 = vadd.f32 %v127, %v878
    %v1013 = vadd.f32 %v128, %v881
    %v1014 = vadd.f32 %v129, %v886
    %v1015 = vadd.f32 %v130, %v889
    %v1016 = vadd.f32 %v131, %v894
    %v1017 = vadd.f32 %v132, %v897
    %v1018 = vadd.f32 %v133, %v902
    %v1019 = vadd.f32 %v134, %v905
    %v1020 = vadd.f32 %v135, %v910
    %v1021 = vadd.f32 %v136, %v913
    %v1022 = vadd.f32 %v137, %v918
    %v1023 = vadd.f32 %v138, %v921
    %v1024 = vadd.f32 %v139, %v926
    %v1025 = vadd.f32 %v140, %v929
    %v1026 = vadd.f32 %v141, %v934
    %v1027 = vadd.f32 %v142, %v937
    %v1028 = vadd.f32 %v143, %v942
    %v1029 = vadd.f32 %v144, %v945
    %v1030 = vadd.f32 %v145, %v950
    %v1031 = vadd.f32 %v146, %v953
    %v1032 = vadd.f32 %v147, %v958
    %v1033 = vadd.f32 %v148, %v961
    %v1034 = vadd.f32 %v149, %v966
    %v1035 = vadd.f32 %v150, %v969
    %1036 = vst [vmem:[#allocation2] sm:$0xff] %v972
    %1037 = vst [vmem:[#allocation2 + $0x8] sm:$0xff] %v973
    %1038 = vst [vmem:[#allocation2 + $0x10] sm:$0xff] %v974
    %1039 = vst [vmem:[#allocation2 + $0x18] sm:$0xff] %v975
    %1040 = vst [vmem:[#allocation2 + $0x20] sm:$0xff] %v976
    %1041 = vst [vmem:[#allocation2 + $0x28] sm:$0xff] %v977
    %1042 = vst [vmem:[#allocation2 + $0x30] sm:$0xff] %v978
    %1043 = vst [vmem:[#allocation2 + $0x38] sm:$0xff] %v979
    %1044 = vst [vmem:[#allocation2 + $0x40] sm:$0xff] %v980
    %1045 = vst [vmem:[#allocation2 + $0x48] sm:$0xff] %v981
    %1046 = vst [vmem:[#allocation2 + $0x50] sm:$0xff] %v982
    %1047 = vst [vmem:[#allocation2 + $0x58] sm:$0xff] %v983
    %1048 = vst [vmem:[#allocation2 + $0x60] sm:$0xff] %v984
    %1049 = vst [vmem:[#allocation2 + $0x68] sm:$0xff] %v985
    %1050 = vst [vmem:[#allocation2 + $0x70] sm:$0xff] %v986
    %1051 = vst [vmem:[#allocation2 + $0x78] sm:$0xff] %v987
    %1052 = vst [vmem:[#allocation2 + $0x80] sm:$0xff] %v988
    %1053 = vst [vmem:[#allocation2 + $0x88] sm:$0xff] %v989
    %1054 = vst [vmem:[#allocation2 + $0x90] sm:$0xff] %v990
    %1055 = vst [vmem:[#allocation2 + $0x98] sm:$0xff] %v991
    %1056 = vst [vmem:[#allocation2 + $0xa0] sm:$0xff] %v992
    %1057 = vst [vmem:[#allocation2 + $0xa8] sm:$0xff] %v993
    %1058 = vst [vmem:[#allocation2 + $0xb0] sm:$0xff] %v994
    %1059 = vst [vmem:[#allocation2 + $0xb8] sm:$0xff] %v995
    %1060 = vst [vmem:[#allocation2 + $0xc0] sm:$0xff] %v996
    %1061 = vst [vmem:[#allocation2 + $0xc8] sm:$0xff] %v997
    %1062 = vst [vmem:[#allocation2 + $0xd0] sm:$0xff] %v998
    %1063 = vst [vmem:[#allocation2 + $0xd8] sm:$0xff] %v999
    %1064 = vst [vmem:[#allocation2 + $0xe0] sm:$0xff] %v1000
    %1065 = vst [vmem:[#allocation2 + $0xe8] sm:$0xff] %v1001
    %1066 = vst [vmem:[#allocation2 + $0xf0] sm:$0xff] %v1002
    %1067 = vst [vmem:[#allocation2 + $0xf8] sm:$0xff] %v1003
    %1068 = vst [vmem:[#allocation2 + $0x100] sm:$0xff] %v1004
    %1069 = vst [vmem:[#allocation2 + $0x108] sm:$0xff] %v1005
    %1070 = vst [vmem:[#allocation2 + $0x110] sm:$0xff] %v1006
    %1071 = vst [vmem:[#allocation2 + $0x118] sm:$0xff] %v1007
    %1072 = vst [vmem:[#allocation2 + $0x120] sm:$0xff] %v1008
    %1073 = vst [vmem:[#allocation2 + $0x128] sm:$0xff] %v1009
    %1074 = vst [vmem:[#allocation2 + $0x130] sm:$0xff] %v1010
    %1075 = vst [vmem:[#allocation2 + $0x138] sm:$0xff] %v1011
    %1076 = vst [vmem:[#allocation2 + $0x140] sm:$0xff] %v1012
    %1077 = vst [vmem:[#allocation2 + $0x148] sm:$0xff] %v1013
    %1078 = vst [vmem:[#allocation2 + $0x150] sm:$0xff] %v1014
    %1079 = vst [vmem:[#allocation2 + $0x158] sm:$0xff] %v1015
    %1080 = vst [vmem:[#allocation2 + $0x160] sm:$0xff] %v1016
    %1081 = vst [vmem:[#allocation2 + $0x168] sm:$0xff] %v1017
    %1082 = vst [vmem:[#allocation2 + $0x170] sm:$0xff] %v1018
    %1083 = vst [vmem:[#allocation2 + $0x178] sm:$0xff] %v1019
    %1084 = vst [vmem:[#allocation2 + $0x180] sm:$0xff] %v1020
    %1085 = vst [vmem:[#allocation2 + $0x188] sm:$0xff] %v1021
    %1086 = vst [vmem:[#allocation2 + $0x190] sm:$0xff] %v1022
    %1087 = vst [vmem:[#allocation2 + $0x198] sm:$0xff] %v1023
    %1088 = vst [vmem:[#allocation2 + $0x1a0] sm:$0xff] %v1024
    %1089 = vst [vmem:[#allocation2 + $0x1a8] sm:$0xff] %v1025
    %1090 = vst [vmem:[#allocation2 + $0x1b0] sm:$0xff] %v1026
    %1091 = vst [vmem:[#allocation2 + $0x1b8] sm:$0xff] %v1027
    %1092 = vst [vmem:[#allocation2 + $0x1c0] sm:$0xff] %v1028
    %1093 = vst [vmem:[#allocation2 + $0x1c8] sm:$0xff] %v1029
    %1094 = vst [vmem:[#allocation2 + $0x1d0] sm:$0xff] %v1030
    %1095 = vst [vmem:[#allocation2 + $0x1d8] sm:$0xff] %v1031
    %1096 = vst [vmem:[#allocation2 + $0x1e0] sm:$0xff] %v1032
    %1097 = vst [vmem:[#allocation2 + $0x1e8] sm:$0xff] %v1033
    %1098 = vst [vmem:[#allocation2 + $0x1f0] sm:$0xff] %v1034
    %1099 = vst [vmem:[#allocation2 + $0x1f8] sm:$0xff] %v1035
    // Predicated region
    $region22: #{tpu_custom_call.1} parent=1 // pred_check
      %p1100 = pneg %p19
    $region23: #{tpu_custom_call.1} parent=1 // pred_check_branch
      %1102 = sbr.rel (%p1100) target = $region25
    $region24: #{tpu_custom_call.1} parent=1 // pred_region
      %v1103 = vld [vmem:[#allocation2] sm:$0xff]
      %v1104 = vld [vmem:[#allocation2 + $0x8] sm:$0xff]
      %v1105 = vld [vmem:[#allocation2 + $0x10] sm:$0xff]
      %v1106 = vld [vmem:[#allocation2 + $0x18] sm:$0xff]
      %v1107 = vld [vmem:[#allocation2 + $0x20] sm:$0xff]
      %v1108 = vld [vmem:[#allocation2 + $0x28] sm:$0xff]
      %v1109 = vld [vmem:[#allocation2 + $0x30] sm:$0xff]
      %v1110 = vld [vmem:[#allocation2 + $0x38] sm:$0xff]
      %v1111 = vld [vmem:[#allocation2 + $0x40] sm:$0xff]
      %v1112 = vld [vmem:[#allocation2 + $0x48] sm:$0xff]
      %v1113 = vld [vmem:[#allocation2 + $0x50] sm:$0xff]
      %v1114 = vld [vmem:[#allocation2 + $0x58] sm:$0xff]
      %v1115 = vld [vmem:[#allocation2 + $0x60] sm:$0xff]
      %v1116 = vld [vmem:[#allocation2 + $0x68] sm:$0xff]
      %v1117 = vld [vmem:[#allocation2 + $0x70] sm:$0xff]
      %v1118 = vld [vmem:[#allocation2 + $0x78] sm:$0xff]
      %v1119 = vld [vmem:[#allocation2 + $0x80] sm:$0xff]
      %v1120 = vld [vmem:[#allocation2 + $0x88] sm:$0xff]
      %v1121 = vld [vmem:[#allocation2 + $0x90] sm:$0xff]
      %v1122 = vld [vmem:[#allocation2 + $0x98] sm:$0xff]
      %v1123 = vld [vmem:[#allocation2 + $0xa0] sm:$0xff]
      %v1124 = vld [vmem:[#allocation2 + $0xa8] sm:$0xff]
      %v1125 = vld [vmem:[#allocation2 + $0xb0] sm:$0xff]
      %v1126 = vld [vmem:[#allocation2 + $0xb8] sm:$0xff]
      %v1127 = vld [vmem:[#allocation2 + $0xc0] sm:$0xff]
      %v1128 = vld [vmem:[#allocation2 + $0xc8] sm:$0xff]
      %v1129 = vld [vmem:[#allocation2 + $0xd0] sm:$0xff]
      %v1130 = vld [vmem:[#allocation2 + $0xd8] sm:$0xff]
      %v1131 = vld [vmem:[#allocation2 + $0xe0] sm:$0xff]
      %v1132 = vld [vmem:[#allocation2 + $0xe8] sm:$0xff]
      %v1133 = vld [vmem:[#allocation2 + $0xf0] sm:$0xff]
      %v1134 = vld [vmem:[#allocation2 + $0xf8] sm:$0xff]
      %v1135 = vld [vmem:[#allocation2 + $0x100] sm:$0xff]
      %v1136 = vld [vmem:[#allocation2 + $0x108] sm:$0xff]
      %v1137 = vld [vmem:[#allocation2 + $0x110] sm:$0xff]
      %v1138 = vld [vmem:[#allocation2 + $0x118] sm:$0xff]
      %v1139 = vld [vmem:[#allocation2 + $0x120] sm:$0xff]
      %v1140 = vld [vmem:[#allocation2 + $0x128] sm:$0xff]
      %v1141 = vld [vmem:[#allocation2 + $0x130] sm:$0xff]
      %v1142 = vld [vmem:[#allocation2 + $0x138] sm:$0xff]
      %v1143 = vld [vmem:[#allocation2 + $0x140] sm:$0xff]
      %v1144 = vld [vmem:[#allocation2 + $0x148] sm:$0xff]
      %v1145 = vld [vmem:[#allocation2 + $0x150] sm:$0xff]
      %v1146 = vld [vmem:[#allocation2 + $0x158] sm:$0xff]
      %v1147 = vld [vmem:[#allocation2 + $0x160] sm:$0xff]
      %v1148 = vld [vmem:[#allocation2 + $0x168] sm:$0xff]
      %v1149 = vld [vmem:[#allocation2 + $0x170] sm:$0xff]
      %v1150 = vld [vmem:[#allocation2 + $0x178] sm:$0xff]
      %v1151 = vld [vmem:[#allocation2 + $0x180] sm:$0xff]
      %v1152 = vld [vmem:[#allocation2 + $0x188] sm:$0xff]
      %v1153 = vld [vmem:[#allocation2 + $0x190] sm:$0xff]
      %v1154 = vld [vmem:[#allocation2 + $0x198] sm:$0xff]
      %v1155 = vld [vmem:[#allocation2 + $0x1a0] sm:$0xff]
      %v1156 = vld [vmem:[#allocation2 + $0x1a8] sm:$0xff]
      %v1157 = vld [vmem:[#allocation2 + $0x1b0] sm:$0xff]
      %v1158 = vld [vmem:[#allocation2 + $0x1b8] sm:$0xff]
      %v1159 = vld [vmem:[#allocation2 + $0x1c0] sm:$0xff]
      %v1160 = vld [vmem:[#allocation2 + $0x1c8] sm:$0xff]
      %v1161 = vld [vmem:[#allocation2 + $0x1d0] sm:$0xff]
      %v1162 = vld [vmem:[#allocation2 + $0x1d8] sm:$0xff]
      %v1163 = vld [vmem:[#allocation2 + $0x1e0] sm:$0xff]
      %v1164 = vld [vmem:[#allocation2 + $0x1e8] sm:$0xff]
      %v1165 = vld [vmem:[#allocation2 + $0x1f0] sm:$0xff]
      %v1166 = vld [vmem:[#allocation2 + $0x1f8] sm:$0xff]
      %v1167 = vadd.f32 %v1103, %v1104
      %v1168 = vadd.f32 %v1167, %v1105
      %v1169 = vadd.f32 %v1168, %v1106
      %v1170 = vadd.f32 %v1169, %v1107
      %v1171 = vadd.f32 %v1170, %v1108
      %v1172 = vadd.f32 %v1171, %v1109
      %v1173 = vadd.f32 %v1172, %v1110
      %v1174 = vadd.f32 %v1173, %v1111
      %v1175 = vadd.f32 %v1174, %v1112
      %v1176 = vadd.f32 %v1175, %v1113
      %v1177 = vadd.f32 %v1176, %v1114
      %v1178 = vadd.f32 %v1177, %v1115
      %v1179 = vadd.f32 %v1178, %v1116
      %v1180 = vadd.f32 %v1179, %v1117
      %v1181 = vadd.f32 %v1180, %v1118
      %v1182 = vadd.f32 %v1181, %v1119
      %v1183 = vadd.f32 %v1182, %v1120
      %v1184 = vadd.f32 %v1183, %v1121
      %v1185 = vadd.f32 %v1184, %v1122
      %v1186 = vadd.f32 %v1185, %v1123
      %v1187 = vadd.f32 %v1186, %v1124
      %v1188 = vadd.f32 %v1187, %v1125
      %v1189 = vadd.f32 %v1188, %v1126
      %v1190 = vadd.f32 %v1189, %v1127
      %v1191 = vadd.f32 %v1190, %v1128
      %v1192 = vadd.f32 %v1191, %v1129
      %v1193 = vadd.f32 %v1192, %v1130
      %v1194 = vadd.f32 %v1193, %v1131
      %v1195 = vadd.f32 %v1194, %v1132
      %v1196 = vadd.f32 %v1195, %v1133
      %v1197 = vadd.f32 %v1196, %v1134
      %v1198 = vadd.f32 %v1197, %v1135
      %v1199 = vadd.f32 %v1198, %v1136
      %v1200 = vadd.f32 %v1199, %v1137
      %v1201 = vadd.f32 %v1200, %v1138
      %v1202 = vadd.f32 %v1201, %v1139
      %v1203 = vadd.f32 %v1202, %v1140
      %v1204 = vadd.f32 %v1203, %v1141
      %v1205 = vadd.f32 %v1204, %v1142
      %v1206 = vadd.f32 %v1205, %v1143
      %v1207 = vadd.f32 %v1206, %v1144
      %v1208 = vadd.f32 %v1207, %v1145
      %v1209 = vadd.f32 %v1208, %v1146
      %v1210 = vadd.f32 %v1209, %v1147
      %v1211 = vadd.f32 %v1210, %v1148
      %v1212 = vadd.f32 %v1211, %v1149
      %v1213 = vadd.f32 %v1212, %v1150
      %v1214 = vadd.f32 %v1213, %v1151
      %v1215 = vadd.f32 %v1214, %v1152
      %v1216 = vadd.f32 %v1215, %v1153
      %v1217 = vadd.f32 %v1216, %v1154
      %v1218 = vadd.f32 %v1217, %v1155
      %v1219 = vadd.f32 %v1218, %v1156
      %v1220 = vadd.f32 %v1219, %v1157
      %v1221 = vadd.f32 %v1220, %v1158
      %v1222 = vadd.f32 %v1221, %v1159
      %v1223 = vadd.f32 %v1222, %v1160
      %v1224 = vadd.f32 %v1223, %v1161
      %v1225 = vadd.f32 %v1224, %v1162
      %v1226 = vadd.f32 %v1225, %v1163
      %v1227 = vadd.f32 %v1226, %v1164
      %v1228 = vadd.f32 %v1227, %v1165
      %v1229 = vadd.f32 %v1228, %v1166
      %v1230 = vrot.slane %v1229, 4
      %v1231 = vadd.f32 %v1229, %v1230
      %v1232 = vrot.slane %v1231, 2
      %v1233 = vadd.f32 %v1231, %v1232
      %v1234 = vrot.slane %v1233, 1
      %v1235 = vadd.f32 %v1233, %v1234
      %v1236 = vmul.f32 %v1235, 0.001953125
      %v1237 = vsub.f32 %v1103, %v1236
      %v1238 = vsub.f32 %v1104, %v1236
      %v1239 = vsub.f32 %v1105, %v1236
      %v1240 = vsub.f32 %v1106, %v1236
      %v1241 = vsub.f32 %v1107, %v1236
      %v1242 = vsub.f32 %v1108, %v1236
      %v1243 = vsub.f32 %v1109, %v1236
      %v1244 = vsub.f32 %v1110, %v1236
      %v1245 = vsub.f32 %v1111, %v1236
      %v1246 = vsub.f32 %v1112, %v1236
      %v1247 = vsub.f32 %v1113, %v1236
      %v1248 = vsub.f32 %v1114, %v1236
      %v1249 = vsub.f32 %v1115, %v1236
      %v1250 = vsub.f32 %v1116, %v1236
      %v1251 = vsub.f32 %v1117, %v1236
      %v1252 = vsub.f32 %v1118, %v1236
      %v1253 = vsub.f32 %v1119, %v1236
      %v1254 = vsub.f32 %v1120, %v1236
      %v1255 = vsub.f32 %v1121, %v1236
      %v1256 = vsub.f32 %v1122, %v1236
      %v1257 = vsub.f32 %v1123, %v1236
      %v1258 = vsub.f32 %v1124, %v1236
      %v1259 = vsub.f32 %v1125, %v1236
      %v1260 = vsub.f32 %v1126, %v1236
      %v1261 = vsub.f32 %v1127, %v1236
      %v1262 = vsub.f32 %v1128, %v1236
      %v1263 = vsub.f32 %v1129, %v1236
      %v1264 = vsub.f32 %v1130, %v1236
      %v1265 = vsub.f32 %v1131, %v1236
      %v1266 = vsub.f32 %v1132, %v1236
      %v1267 = vsub.f32 %v1133, %v1236
      %v1268 = vsub.f32 %v1134, %v1236
      %v1269 = vsub.f32 %v1135, %v1236
      %v1270 = vsub.f32 %v1136, %v1236
      %v1271 = vsub.f32 %v1137, %v1236
      %v1272 = vsub.f32 %v1138, %v1236
      %v1273 = vsub.f32 %v1139, %v1236
      %v1274 = vsub.f32 %v1140, %v1236
      %v1275 = vsub.f32 %v1141, %v1236
      %v1276 = vsub.f32 %v1142, %v1236
      %v1277 = vsub.f32 %v1143, %v1236
      %v1278 = vsub.f32 %v1144, %v1236
      %v1279 = vsub.f32 %v1145, %v1236
      %v1280 = vsub.f32 %v1146, %v1236
      %v1281 = vsub.f32 %v1147, %v1236
      %v1282 = vsub.f32 %v1148, %v1236
      %v1283 = vsub.f32 %v1149, %v1236
      %v1284 = vsub.f32 %v1150, %v1236
      %v1285 = vsub.f32 %v1151, %v1236
      %v1286 = vsub.f32 %v1152, %v1236
      %v1287 = vsub.f32 %v1153, %v1236
      %v1288 = vsub.f32 %v1154, %v1236
      %v1289 = vsub.f32 %v1155, %v1236
      %v1290 = vsub.f32 %v1156, %v1236
      %v1291 = vsub.f32 %v1157, %v1236
      %v1292 = vsub.f32 %v1158, %v1236
      %v1293 = vsub.f32 %v1159, %v1236
      %v1294 = vsub.f32 %v1160, %v1236
      %v1295 = vsub.f32 %v1161, %v1236
      %v1296 = vsub.f32 %v1162, %v1236
      %v1297 = vsub.f32 %v1163, %v1236
      %v1298 = vsub.f32 %v1164, %v1236
      %v1299 = vsub.f32 %v1165, %v1236
      %v1300 = vsub.f32 %v1166, %v1236
      %v1301 = vmul.f32 %v1237, %v1237
      %v1302 = vmul.f32 %v1238, %v1238
      %v1303 = vmul.f32 %v1239, %v1239
      %v1304 = vmul.f32 %v1240, %v1240
      %v1305 = vmul.f32 %v1241, %v1241
      %v1306 = vmul.f32 %v1242, %v1242
      %v1307 = vmul.f32 %v1243, %v1243
      %v1308 = vmul.f32 %v1244, %v1244
      %v1309 = vmul.f32 %v1245, %v1245
      %v1310 = vmul.f32 %v1246, %v1246
      %v1311 = vmul.f32 %v1247, %v1247
      %v1312 = vmul.f32 %v1248, %v1248
      %v1313 = vmul.f32 %v1249, %v1249
      %v1314 = vmul.f32 %v1250, %v1250
      %v1315 = vmul.f32 %v1251, %v1251
      %v1316 = vmul.f32 %v1252, %v1252
      %v1317 = vmul.f32 %v1253, %v1253
      %v1318 = vmul.f32 %v1254, %v1254
      %v1319 = vmul.f32 %v1255, %v1255
      %v1320 = vmul.f32 %v1256, %v1256
      %v1321 = vmul.f32 %v1257, %v1257
      %v1322 = vmul.f32 %v1258, %v1258
      %v1323 = vmul.f32 %v1259, %v1259
      %v1324 = vmul.f32 %v1260, %v1260
      %v1325 = vmul.f32 %v1261, %v1261
      %v1326 = vmul.f32 %v1262, %v1262
      %v1327 = vmul.f32 %v1263, %v1263
      %v1328 = vmul.f32 %v1264, %v1264
      %v1329 = vmul.f32 %v1265, %v1265
      %v1330 = vmul.f32 %v1266, %v1266
      %v1331 = vmul.f32 %v1267, %v1267
      %v1332 = vmul.f32 %v1268, %v1268
      %v1333 = vmul.f32 %v1269, %v1269
      %v1334 = vmul.f32 %v1270, %v1270
      %v1335 = vmul.f32 %v1271, %v1271
      %v1336 = vmul.f32 %v1272, %v1272
      %v1337 = vmul.f32 %v1273, %v1273
      %v1338 = vmul.f32 %v1274, %v1274
      %v1339 = vmul.f32 %v1275, %v1275
      %v1340 = vmul.f32 %v1276, %v1276
      %v1341 = vmul.f32 %v1277, %v1277
      %v1342 = vmul.f32 %v1278, %v1278
      %v1343 = vmul.f32 %v1279, %v1279
      %v1344 = vmul.f32 %v1280, %v1280
      %v1345 = vmul.f32 %v1281, %v1281
      %v1346 = vmul.f32 %v1282, %v1282
      %v1347 = vmul.f32 %v1283, %v1283
      %v1348 = vmul.f32 %v1284, %v1284
      %v1349 = vmul.f32 %v1285, %v1285
      %v1350 = vmul.f32 %v1286, %v1286
      %v1351 = vmul.f32 %v1287, %v1287
      %v1352 = vmul.f32 %v1288, %v1288
      %v1353 = vmul.f32 %v1289, %v1289
      %v1354 = vmul.f32 %v1290, %v1290
      %v1355 = vmul.f32 %v1291, %v1291
      %v1356 = vmul.f32 %v1292, %v1292
      %v1357 = vmul.f32 %v1293, %v1293
      %v1358 = vmul.f32 %v1294, %v1294
      %v1359 = vmul.f32 %v1295, %v1295
      %v1360 = vmul.f32 %v1296, %v1296
      %v1361 = vmul.f32 %v1297, %v1297
      %v1362 = vmul.f32 %v1298, %v1298
      %v1363 = vmul.f32 %v1299, %v1299
      %v1364 = vmul.f32 %v1300, %v1300
      %v1365 = vadd.f32 %v1301, %v1302
      %v1366 = vadd.f32 %v1365, %v1303
      %v1367 = vadd.f32 %v1366, %v1304
      %v1368 = vadd.f32 %v1367, %v1305
      %v1369 = vadd.f32 %v1368, %v1306
      %v1370 = vadd.f32 %v1369, %v1307
      %v1371 = vadd.f32 %v1370, %v1308
      %v1372 = vadd.f32 %v1371, %v1309
      %v1373 = vadd.f32 %v1372, %v1310
      %v1374 = vadd.f32 %v1373, %v1311
      %v1375 = vadd.f32 %v1374, %v1312
      %v1376 = vadd.f32 %v1375, %v1313
      %v1377 = vadd.f32 %v1376, %v1314
      %v1378 = vadd.f32 %v1377, %v1315
      %v1379 = vadd.f32 %v1378, %v1316
      %v1380 = vadd.f32 %v1379, %v1317
      %v1381 = vadd.f32 %v1380, %v1318
      %v1382 = vadd.f32 %v1381, %v1319
      %v1383 = vadd.f32 %v1382, %v1320
      %v1384 = vadd.f32 %v1383, %v1321
      %v1385 = vadd.f32 %v1384, %v1322
      %v1386 = vadd.f32 %v1385, %v1323
      %v1387 = vadd.f32 %v1386, %v1324
      %v1388 = vadd.f32 %v1387, %v1325
      %v1389 = vadd.f32 %v1388, %v1326
      %v1390 = vadd.f32 %v1389, %v1327
      %v1391 = vadd.f32 %v1390, %v1328
      %v1392 = vadd.f32 %v1391, %v1329
      %v1393 = vadd.f32 %v1392, %v1330
      %v1394 = vadd.f32 %v1393, %v1331
      %v1395 = vadd.f32 %v1394, %v1332
      %v1396 = vadd.f32 %v1395, %v1333
      %v1397 = vadd.f32 %v1396, %v1334
      %v1398 = vadd.f32 %v1397, %v1335
      %v1399 = vadd.f32 %v1398, %v1336
      %v1400 = vadd.f32 %v1399, %v1337
      %v1401 = vadd.f32 %v1400, %v1338
      %v1402 = vadd.f32 %v1401, %v1339
      %v1403 = vadd.f32 %v1402, %v1340
      %v1404 = vadd.f32 %v1403, %v1341
      %v1405 = vadd.f32 %v1404, %v1342
      %v1406 = vadd.f32 %v1405, %v1343
      %v1407 = vadd.f32 %v1406, %v1344
      %v1408 = vadd.f32 %v1407, %v1345
      %v1409 = vadd.f32 %v1408, %v1346
      %v1410 = vadd.f32 %v1409, %v1347
      %v1411 = vadd.f32 %v1410, %v1348
      %v1412 = vadd.f32 %v1411, %v1349
      %v1413 = vadd.f32 %v1412, %v1350
      %v1414 = vadd.f32 %v1413, %v1351
      %v1415 = vadd.f32 %v1414, %v1352
      %v1416 = vadd.f32 %v1415, %v1353
      %v1417 = vadd.f32 %v1416, %v1354
      %v1418 = vadd.f32 %v1417, %v1355
      %v1419 = vadd.f32 %v1418, %v1356
      %v1420 = vadd.f32 %v1419, %v1357
      %v1421 = vadd.f32 %v1420, %v1358
      %v1422 = vadd.f32 %v1421, %v1359
      %v1423 = vadd.f32 %v1422, %v1360
      %v1424 = vadd.f32 %v1423, %v1361
      %v1425 = vadd.f32 %v1424, %v1362
      %v1426 = vadd.f32 %v1425, %v1363
      %v1427 = vadd.f32 %v1426, %v1364
      %v1428 = vrot.slane %v1427, 4
      %v1429 = vadd.f32 %v1427, %v1428
      %v1430 = vrot.slane %v1429, 2
      %v1431 = vadd.f32 %v1429, %v1430
      %v1432 = vrot.slane %v1431, 1
      %v1433 = vadd.f32 %v1431, %v1432
      %v1434 = vmul.f32 %v1236, 0.0
      %v1435 = vmul.f32 %v1434, %v1236
      %v1436 = vsub.f32 %v1433, %v1435
      %v1437 = vmul.f32 %v1436, 0.001953125
      %v1438 = vmax.f32 %v1437, 0.0
      %v1439 = vld [vmem:[%s2] sm:$0x1]
      %v1440 = vadd.f32 %v1438, 1e-05
      %v1441 = vrsqrt.pop %v1440
      %v1442 = vmul.f32 %v1439, %v1441
      %v1444 = vlaneseq
      %v1445 = vshrl.u32 %v1444, 7
      %v1446 = vsub.s32 0, %v1445
      %v1447 = vrot.slane %v1442, %v1446
      %v1449 = vmul.f32 %v1237, %v1447
      %v1450 = vmul.f32 %v1238, %v1447
      %v1451 = vmul.f32 %v1239, %v1447
      %v1452 = vmul.f32 %v1240, %v1447
      %v1453 = vmul.f32 %v1241, %v1447
      %v1454 = vmul.f32 %v1242, %v1447
      %v1455 = vmul.f32 %v1243, %v1447
      %v1456 = vmul.f32 %v1244, %v1447
      %v1457 = vmul.f32 %v1245, %v1447
      %v1458 = vmul.f32 %v1246, %v1447
      %v1459 = vmul.f32 %v1247, %v1447
      %v1460 = vmul.f32 %v1248, %v1447
      %v1461 = vmul.f32 %v1249, %v1447
      %v1462 = vmul.f32 %v1250, %v1447
      %v1463 = vmul.f32 %v1251, %v1447
      %v1464 = vmul.f32 %v1252, %v1447
      %v1465 = vmul.f32 %v1253, %v1447
      %v1466 = vmul.f32 %v1254, %v1447
      %v1467 = vmul.f32 %v1255, %v1447
      %v1468 = vmul.f32 %v1256, %v1447
      %v1469 = vmul.f32 %v1257, %v1447
      %v1470 = vmul.f32 %v1258, %v1447
      %v1471 = vmul.f32 %v1259, %v1447
      %v1472 = vmul.f32 %v1260, %v1447
      %v1473 = vmul.f32 %v1261, %v1447
      %v1474 = vmul.f32 %v1262, %v1447
      %v1475 = vmul.f32 %v1263, %v1447
      %v1476 = vmul.f32 %v1264, %v1447
      %v1477 = vmul.f32 %v1265, %v1447
      %v1478 = vmul.f32 %v1266, %v1447
      %v1479 = vmul.f32 %v1267, %v1447
      %v1480 = vmul.f32 %v1268, %v1447
      %v1481 = vmul.f32 %v1269, %v1447
      %v1482 = vmul.f32 %v1270, %v1447
      %v1483 = vmul.f32 %v1271, %v1447
      %v1484 = vmul.f32 %v1272, %v1447
      %v1485 = vmul.f32 %v1273, %v1447
      %v1486 = vmul.f32 %v1274, %v1447
      %v1487 = vmul.f32 %v1275, %v1447
      %v1488 = vmul.f32 %v1276, %v1447
      %v1489 = vmul.f32 %v1277, %v1447
      %v1490 = vmul.f32 %v1278, %v1447
      %v1491 = vmul.f32 %v1279, %v1447
      %v1492 = vmul.f32 %v1280, %v1447
      %v1493 = vmul.f32 %v1281, %v1447
      %v1494 = vmul.f32 %v1282, %v1447
      %v1495 = vmul.f32 %v1283, %v1447
      %v1496 = vmul.f32 %v1284, %v1447
      %v1497 = vmul.f32 %v1285, %v1447
      %v1498 = vmul.f32 %v1286, %v1447
      %v1499 = vmul.f32 %v1287, %v1447
      %v1500 = vmul.f32 %v1288, %v1447
      %v1501 = vmul.f32 %v1289, %v1447
      %v1502 = vmul.f32 %v1290, %v1447
      %v1503 = vmul.f32 %v1291, %v1447
      %v1504 = vmul.f32 %v1292, %v1447
      %v1505 = vmul.f32 %v1293, %v1447
      %v1506 = vmul.f32 %v1294, %v1447
      %v1507 = vmul.f32 %v1295, %v1447
      %v1508 = vmul.f32 %v1296, %v1447
      %v1509 = vmul.f32 %v1297, %v1447
      %v1510 = vmul.f32 %v1298, %v1447
      %v1511 = vmul.f32 %v1299, %v1447
      %v1512 = vmul.f32 %v1300, %v1447
      %v1513 = vld [vmem:[%s3] sm:$0x1]
      %v1515 = vlaneseq
      %v1516 = vshrl.u32 %v1515, 7
      %v1517 = vsub.s32 0, %v1516
      %v1518 = vrot.slane %v1513, %v1517
      %v1520 = vadd.f32 %v1449, %v1518
      %v1521 = vadd.f32 %v1450, %v1518
      %v1522 = vadd.f32 %v1451, %v1518
      %v1523 = vadd.f32 %v1452, %v1518
      %v1524 = vadd.f32 %v1453, %v1518
      %v1525 = vadd.f32 %v1454, %v1518
      %v1526 = vadd.f32 %v1455, %v1518
      %v1527 = vadd.f32 %v1456, %v1518
      %v1528 = vadd.f32 %v1457, %v1518
      %v1529 = vadd.f32 %v1458, %v1518
      %v1530 = vadd.f32 %v1459, %v1518
      %v1531 = vadd.f32 %v1460, %v1518
      %v1532 = vadd.f32 %v1461, %v1518
      %v1533 = vadd.f32 %v1462, %v1518
      %v1534 = vadd.f32 %v1463, %v1518
      %v1535 = vadd.f32 %v1464, %v1518
      %v1536 = vadd.f32 %v1465, %v1518
      %v1537 = vadd.f32 %v1466, %v1518
      %v1538 = vadd.f32 %v1467, %v1518
      %v1539 = vadd.f32 %v1468, %v1518
      %v1540 = vadd.f32 %v1469, %v1518
      %v1541 = vadd.f32 %v1470, %v1518
      %v1542 = vadd.f32 %v1471, %v1518
      %v1543 = vadd.f32 %v1472, %v1518
      %v1544 = vadd.f32 %v1473, %v1518
      %v1545 = vadd.f32 %v1474, %v1518
      %v1546 = vadd.f32 %v1475, %v1518
      %v1547 = vadd.f32 %v1476, %v1518
      %v1548 = vadd.f32 %v1477, %v1518
      %v1549 = vadd.f32 %v1478, %v1518
      %v1550 = vadd.f32 %v1479, %v1518
      %v1551 = vadd.f32 %v1480, %v1518
      %v1552 = vadd.f32 %v1481, %v1518
      %v1553 = vadd.f32 %v1482, %v1518
      %v1554 = vadd.f32 %v1483, %v1518
      %v1555 = vadd.f32 %v1484, %v1518
      %v1556 = vadd.f32 %v1485, %v1518
      %v1557 = vadd.f32 %v1486, %v1518
      %v1558 = vadd.f32 %v1487, %v1518
      %v1559 = vadd.f32 %v1488, %v1518
      %v1560 = vadd.f32 %v1489, %v1518
      %v1561 = vadd.f32 %v1490, %v1518
      %v1562 = vadd.f32 %v1491, %v1518
      %v1563 = vadd.f32 %v1492, %v1518
      %v1564 = vadd.f32 %v1493, %v1518
      %v1565 = vadd.f32 %v1494, %v1518
      %v1566 = vadd.f32 %v1495, %v1518
      %v1567 = vadd.f32 %v1496, %v1518
      %v1568 = vadd.f32 %v1497, %v1518
      %v1569 = vadd.f32 %v1498, %v1518
      %v1570 = vadd.f32 %v1499, %v1518
      %v1571 = vadd.f32 %v1500, %v1518
      %v1572 = vadd.f32 %v1501, %v1518
      %v1573 = vadd.f32 %v1502, %v1518
      %v1574 = vadd.f32 %v1503, %v1518
      %v1575 = vadd.f32 %v1504, %v1518
      %v1576 = vadd.f32 %v1505, %v1518
      %v1577 = vadd.f32 %v1506, %v1518
      %v1578 = vadd.f32 %v1507, %v1518
      %v1579 = vadd.f32 %v1508, %v1518
      %v1580 = vadd.f32 %v1509, %v1518
      %v1581 = vadd.f32 %v1510, %v1518
      %v1582 = vadd.f32 %v1511, %v1518
      %v1583 = vadd.f32 %v1512, %v1518
      %v1584 = vmax.f32 %v1520, 0.0
      %v1585 = vmax.f32 %v1521, 0.0
      %v1586 = vmax.f32 %v1522, 0.0
      %v1587 = vmax.f32 %v1523, 0.0
      %v1588 = vmax.f32 %v1524, 0.0
      %v1589 = vmax.f32 %v1525, 0.0
      %v1590 = vmax.f32 %v1526, 0.0
      %v1591 = vmax.f32 %v1527, 0.0
      %v1592 = vmax.f32 %v1528, 0.0
      %v1593 = vmax.f32 %v1529, 0.0
      %v1594 = vmax.f32 %v1530, 0.0
      %v1595 = vmax.f32 %v1531, 0.0
      %v1596 = vmax.f32 %v1532, 0.0
      %v1597 = vmax.f32 %v1533, 0.0
      %v1598 = vmax.f32 %v1534, 0.0
      %v1599 = vmax.f32 %v1535, 0.0
      %v1600 = vmax.f32 %v1536, 0.0
      %v1601 = vmax.f32 %v1537, 0.0
      %v1602 = vmax.f32 %v1538, 0.0
      %v1603 = vmax.f32 %v1539, 0.0
      %v1604 = vmax.f32 %v1540, 0.0
      %v1605 = vmax.f32 %v1541, 0.0
      %v1606 = vmax.f32 %v1542, 0.0
      %v1607 = vmax.f32 %v1543, 0.0
      %v1608 = vmax.f32 %v1544, 0.0
      %v1609 = vmax.f32 %v1545, 0.0
      %v1610 = vmax.f32 %v1546, 0.0
      %v1611 = vmax.f32 %v1547, 0.0
      %v1612 = vmax.f32 %v1548, 0.0
      %v1613 = vmax.f32 %v1549, 0.0
      %v1614 = vmax.f32 %v1550, 0.0
      %v1615 = vmax.f32 %v1551, 0.0
      %v1616 = vmax.f32 %v1552, 0.0
      %v1617 = vmax.f32 %v1553, 0.0
      %v1618 = vmax.f32 %v1554, 0.0
      %v1619 = vmax.f32 %v1555, 0.0
      %v1620 = vmax.f32 %v1556, 0.0
      %v1621 = vmax.f32 %v1557, 0.0
      %v1622 = vmax.f32 %v1558, 0.0
      %v1623 = vmax.f32 %v1559, 0.0
      %v1624 = vmax.f32 %v1560, 0.0
      %v1625 = vmax.f32 %v1561, 0.0
      %v1626 = vmax.f32 %v1562, 0.0
      %v1627 = vmax.f32 %v1563, 0.0
      %v1628 = vmax.f32 %v1564, 0.0
      %v1629 = vmax.f32 %v1565, 0.0
      %v1630 = vmax.f32 %v1566, 0.0
      %v1631 = vmax.f32 %v1567, 0.0
      %v1632 = vmax.f32 %v1568, 0.0
      %v1633 = vmax.f32 %v1569, 0.0
      %v1634 = vmax.f32 %v1570, 0.0
      %v1635 = vmax.f32 %v1571, 0.0
      %v1636 = vmax.f32 %v1572, 0.0
      %v1637 = vmax.f32 %v1573, 0.0
      %v1638 = vmax.f32 %v1574, 0.0
      %v1639 = vmax.f32 %v1575, 0.0
      %v1640 = vmax.f32 %v1576, 0.0
      %v1641 = vmax.f32 %v1577, 0.0
      %v1642 = vmax.f32 %v1578, 0.0
      %v1643 = vmax.f32 %v1579, 0.0
      %v1644 = vmax.f32 %v1580, 0.0
      %v1645 = vmax.f32 %v1581, 0.0
      %v1646 = vmax.f32 %v1582, 0.0
      %v1647 = vmax.f32 %v1583, 0.0
      %v1648 = vpack.c.bf16 %v1585, %v1584
      %v1649 = vpack.c.bf16 %v1587, %v1586
      %v1650 = vpack.c.bf16 %v1589, %v1588
      %v1651 = vpack.c.bf16 %v1591, %v1590
      %v1652 = vpack.c.bf16 %v1593, %v1592
      %v1653 = vpack.c.bf16 %v1595, %v1594
      %v1654 = vpack.c.bf16 %v1597, %v1596
      %v1655 = vpack.c.bf16 %v1599, %v1598
      %v1656 = vpack.c.bf16 %v1601, %v1600
      %v1657 = vpack.c.bf16 %v1603, %v1602
      %v1658 = vpack.c.bf16 %v1605, %v1604
      %v1659 = vpack.c.bf16 %v1607, %v1606
      %v1660 = vpack.c.bf16 %v1609, %v1608
      %v1661 = vpack.c.bf16 %v1611, %v1610
      %v1662 = vpack.c.bf16 %v1613, %v1612
      %v1663 = vpack.c.bf16 %v1615, %v1614
      %v1664 = vpack.c.bf16 %v1617, %v1616
      %v1665 = vpack.c.bf16 %v1619, %v1618
      %v1666 = vpack.c.bf16 %v1621, %v1620
      %v1667 = vpack.c.bf16 %v1623, %v1622
      %v1668 = vpack.c.bf16 %v1625, %v1624
      %v1669 = vpack.c.bf16 %v1627, %v1626
      %v1670 = vpack.c.bf16 %v1629, %v1628
      %v1671 = vpack.c.bf16 %v1631, %v1630
      %v1672 = vpack.c.bf16 %v1633, %v1632
      %v1673 = vpack.c.bf16 %v1635, %v1634
      %v1674 = vpack.c.bf16 %v1637, %v1636
      %v1675 = vpack.c.bf16 %v1639, %v1638
      %v1676 = vpack.c.bf16 %v1641, %v1640
      %v1677 = vpack.c.bf16 %v1643, %v1642
      %v1678 = vpack.c.bf16 %v1645, %v1644
      %v1679 = vpack.c.bf16 %v1647, %v1646
      %v1712 = vunpack.c.l.b16 %v1648
      %v1713 = vunpack.c.h.b16 %v1648
      %v1714 = vunpack.c.l.b16 %v1649
      %v1715 = vunpack.c.h.b16 %v1649
      %v1716 = vunpack.c.l.b16 %v1650
      %v1717 = vunpack.c.h.b16 %v1650
      %v1718 = vunpack.c.l.b16 %v1651
      %v1719 = vunpack.c.h.b16 %v1651
      %v1720 = vunpack.c.l.b16 %v1652
      %v1721 = vunpack.c.h.b16 %v1652
      %v1722 = vunpack.c.l.b16 %v1653
      %v1723 = vunpack.c.h.b16 %v1653
      %v1724 = vunpack.c.l.b16 %v1654
      %v1725 = vunpack.c.h.b16 %v1654
      %v1726 = vunpack.c.l.b16 %v1655
      %v1727 = vunpack.c.h.b16 %v1655
      %v1728 = vunpack.c.l.b16 %v1656
      %v1729 = vunpack.c.h.b16 %v1656
      %v1730 = vunpack.c.l.b16 %v1657
      %v1731 = vunpack.c.h.b16 %v1657
      %v1732 = vunpack.c.l.b16 %v1658
      %v1733 = vunpack.c.h.b16 %v1658
      %v1734 = vunpack.c.l.b16 %v1659
      %v1735 = vunpack.c.h.b16 %v1659
      %v1736 = vunpack.c.l.b16 %v1660
      %v1737 = vunpack.c.h.b16 %v1660
      %v1738 = vunpack.c.l.b16 %v1661
      %v1739 = vunpack.c.h.b16 %v1661
      %v1740 = vunpack.c.l.b16 %v1662
      %v1741 = vunpack.c.h.b16 %v1662
      %v1742 = vunpack.c.l.b16 %v1663
      %v1743 = vunpack.c.h.b16 %v1663
      %v1744 = vunpack.c.l.b16 %v1664
      %v1745 = vunpack.c.h.b16 %v1664
      %v1746 = vunpack.c.l.b16 %v1665
      %v1747 = vunpack.c.h.b16 %v1665
      %v1748 = vunpack.c.l.b16 %v1666
      %v1749 = vunpack.c.h.b16 %v1666
      %v1750 = vunpack.c.l.b16 %v1667
      %v1751 = vunpack.c.h.b16 %v1667
      %v1752 = vunpack.c.l.b16 %v1668
      %v1753 = vunpack.c.h.b16 %v1668
      %v1754 = vunpack.c.l.b16 %v1669
      %v1755 = vunpack.c.h.b16 %v1669
      %v1756 = vunpack.c.l.b16 %v1670
      %v1757 = vunpack.c.h.b16 %v1670
      %v1758 = vunpack.c.l.b16 %v1671
      %v1759 = vunpack.c.h.b16 %v1671
      %v1760 = vunpack.c.l.b16 %v1672
      %v1761 = vunpack.c.h.b16 %v1672
      %v1762 = vunpack.c.l.b16 %v1673
      %v1763 = vunpack.c.h.b16 %v1673
      %v1764 = vunpack.c.l.b16 %v1674
      %v1765 = vunpack.c.h.b16 %v1674
      %v1766 = vunpack.c.l.b16 %v1675
      %v1767 = vunpack.c.h.b16 %v1675
      %v1768 = vunpack.c.l.b16 %v1676
      %v1769 = vunpack.c.h.b16 %v1676
      %v1770 = vunpack.c.l.b16 %v1677
      %v1771 = vunpack.c.h.b16 %v1677
      %v1772 = vunpack.c.l.b16 %v1678
      %v1773 = vunpack.c.h.b16 %v1678
      %v1774 = vunpack.c.l.b16 %v1679
      %v1775 = vunpack.c.h.b16 %v1679
      %v1776 = vpack.c.b16 %v1712, %v1712
      %v1777 = vpack.c.b16 %v1713, %v1713
      %v1778 = vpack.c.b16 %v1714, %v1714
      %v1779 = vpack.c.b16 %v1715, %v1715
      %v1780 = vpack.c.b16 %v1716, %v1716
      %v1781 = vpack.c.b16 %v1717, %v1717
      %v1782 = vpack.c.b16 %v1718, %v1718
      %v1783 = vpack.c.b16 %v1719, %v1719
      %v1784 = vpack.c.b16 %v1720, %v1720
      %v1785 = vpack.c.b16 %v1721, %v1721
      %v1786 = vpack.c.b16 %v1722, %v1722
      %v1787 = vpack.c.b16 %v1723, %v1723
      %v1788 = vpack.c.b16 %v1724, %v1724
      %v1789 = vpack.c.b16 %v1725, %v1725
      %v1790 = vpack.c.b16 %v1726, %v1726
      %v1791 = vpack.c.b16 %v1727, %v1727
      %v1792 = vpack.c.b16 %v1728, %v1728
      %v1793 = vpack.c.b16 %v1729, %v1729
      %v1794 = vpack.c.b16 %v1730, %v1730
      %v1795 = vpack.c.b16 %v1731, %v1731
      %v1796 = vpack.c.b16 %v1732, %v1732
      %v1797 = vpack.c.b16 %v1733, %v1733
      %v1798 = vpack.c.b16 %v1734, %v1734
      %v1799 = vpack.c.b16 %v1735, %v1735
      %v1800 = vpack.c.b16 %v1736, %v1736
      %v1801 = vpack.c.b16 %v1737, %v1737
      %v1802 = vpack.c.b16 %v1738, %v1738
      %v1803 = vpack.c.b16 %v1739, %v1739
      %v1804 = vpack.c.b16 %v1740, %v1740
      %v1805 = vpack.c.b16 %v1741, %v1741
      %v1806 = vpack.c.b16 %v1742, %v1742
      %v1807 = vpack.c.b16 %v1743, %v1743
      %v1808 = vpack.c.b16 %v1744, %v1744
      %v1809 = vpack.c.b16 %v1745, %v1745
      %v1810 = vpack.c.b16 %v1746, %v1746
      %v1811 = vpack.c.b16 %v1747, %v1747
      %v1812 = vpack.c.b16 %v1748, %v1748
      %v1813 = vpack.c.b16 %v1749, %v1749
      %v1814 = vpack.c.b16 %v1750, %v1750
      %v1815 = vpack.c.b16 %v1751, %v1751
      %v1816 = vpack.c.b16 %v1752, %v1752
      %v1817 = vpack.c.b16 %v1753, %v1753
      %v1818 = vpack.c.b16 %v1754, %v1754
      %v1819 = vpack.c.b16 %v1755, %v1755
      %v1820 = vpack.c.b16 %v1756, %v1756
      %v1821 = vpack.c.b16 %v1757, %v1757
      %v1822 = vpack.c.b16 %v1758, %v1758
      %v1823 = vpack.c.b16 %v1759, %v1759
      %v1824 = vpack.c.b16 %v1760, %v1760
      %v1825 = vpack.c.b16 %v1761, %v1761
      %v1826 = vpack.c.b16 %v1762, %v1762
      %v1827 = vpack.c.b16 %v1763, %v1763
      %v1828 = vpack.c.b16 %v1764, %v1764
      %v1829 = vpack.c.b16 %v1765, %v1765
      %v1830 = vpack.c.b16 %v1766, %v1766
      %v1831 = vpack.c.b16 %v1767, %v1767
      %v1832 = vpack.c.b16 %v1768, %v1768
      %v1833 = vpack.c.b16 %v1769, %v1769
      %v1834 = vpack.c.b16 %v1770, %v1770
      %v1835 = vpack.c.b16 %v1771, %v1771
      %v1836 = vpack.c.b16 %v1772, %v1772
      %v1837 = vpack.c.b16 %v1773, %v1773
      %v1838 = vpack.c.b16 %v1774, %v1774
      %v1839 = vpack.c.b16 %v1775, %v1775
      %1904 = vst [vmem:[#allocation3] sm:$0xf] %v1776
      %1905 = vst [vmem:[#allocation3 + $0x4] sm:$0xf] %v1777
      %1906 = vst [vmem:[#allocation3 + $0x8] sm:$0xf] %v1778
      %1907 = vst [vmem:[#allocation3 + $0xc] sm:$0xf] %v1779
      %1908 = vst [vmem:[#allocation3 + $0x10] sm:$0xf] %v1780
      %1909 = vst [vmem:[#allocation3 + $0x14] sm:$0xf] %v1781
      %1910 = vst [vmem:[#allocation3 + $0x18] sm:$0xf] %v1782
      %1911 = vst [vmem:[#allocation3 + $0x1c] sm:$0xf] %v1783
      %1912 = vst [vmem:[#allocation3 + $0x20] sm:$0xf] %v1784
      %1913 = vst [vmem:[#allocation3 + $0x24] sm:$0xf] %v1785
      %1914 = vst [vmem:[#allocation3 + $0x28] sm:$0xf] %v1786
      %1915 = vst [vmem:[#allocation3 + $0x2c] sm:$0xf] %v1787
      %1916 = vst [vmem:[#allocation3 + $0x30] sm:$0xf] %v1788
      %1917 = vst [vmem:[#allocation3 + $0x34] sm:$0xf] %v1789
      %1918 = vst [vmem:[#allocation3 + $0x38] sm:$0xf] %v1790
      %1919 = vst [vmem:[#allocation3 + $0x3c] sm:$0xf] %v1791
      %1920 = vst [vmem:[#allocation3 + $0x40] sm:$0xf] %v1792
      %1921 = vst [vmem:[#allocation3 + $0x44] sm:$0xf] %v1793
      %1922 = vst [vmem:[#allocation3 + $0x48] sm:$0xf] %v1794
      %1923 = vst [vmem:[#allocation3 + $0x4c] sm:$0xf] %v1795
      %1924 = vst [vmem:[#allocation3 + $0x50] sm:$0xf] %v1796
      %1925 = vst [vmem:[#allocation3 + $0x54] sm:$0xf] %v1797
      %1926 = vst [vmem:[#allocation3 + $0x58] sm:$0xf] %v1798
      %1927 = vst [vmem:[#allocation3 + $0x5c] sm:$0xf] %v1799
      %1928 = vst [vmem:[#allocation3 + $0x60] sm:$0xf] %v1800
      %1929 = vst [vmem:[#allocation3 + $0x64] sm:$0xf] %v1801
      %1930 = vst [vmem:[#allocation3 + $0x68] sm:$0xf] %v1802
      %1931 = vst [vmem:[#allocation3 + $0x6c] sm:$0xf] %v1803
      %1932 = vst [vmem:[#allocation3 + $0x70] sm:$0xf] %v1804
      %1933 = vst [vmem:[#allocation3 + $0x74] sm:$0xf] %v1805
      %1934 = vst [vmem:[#allocation3 + $0x78] sm:$0xf] %v1806
      %1935 = vst [vmem:[#allocation3 + $0x7c] sm:$0xf] %v1807
      %1936 = vst [vmem:[#allocation3 + $0x80] sm:$0xf] %v1808
      %1937 = vst [vmem:[#allocation3 + $0x84] sm:$0xf] %v1809
      %1938 = vst [vmem:[#allocation3 + $0x88] sm:$0xf] %v1810
      %1939 = vst [vmem:[#allocation3 + $0x8c] sm:$0xf] %v1811
      %1940 = vst [vmem:[#allocation3 + $0x90] sm:$0xf] %v1812
      %1941 = vst [vmem:[#allocation3 + $0x94] sm:$0xf] %v1813
      %1942 = vst [vmem:[#allocation3 + $0x98] sm:$0xf] %v1814
      %1943 = vst [vmem:[#allocation3 + $0x9c] sm:$0xf] %v1815
      %1944 = vst [vmem:[#allocation3 + $0xa0] sm:$0xf] %v1816
      %1945 = vst [vmem:[#allocation3 + $0xa4] sm:$0xf] %v1817
      %1946 = vst [vmem:[#allocation3 + $0xa8] sm:$0xf] %v1818
      %1947 = vst [vmem:[#allocation3 + $0xac] sm:$0xf] %v1819
      %1948 = vst [vmem:[#allocation3 + $0xb0] sm:$0xf] %v1820
      %1949 = vst [vmem:[#allocation3 + $0xb4] sm:$0xf] %v1821
      %1950 = vst [vmem:[#allocation3 + $0xb8] sm:$0xf] %v1822
      %1951 = vst [vmem:[#allocation3 + $0xbc] sm:$0xf] %v1823
      %1952 = vst [vmem:[#allocation3 + $0xc0] sm:$0xf] %v1824
      %1953 = vst [vmem:[#allocation3 + $0xc4] sm:$0xf] %v1825
      %1954 = vst [vmem:[#allocation3 + $0xc8] sm:$0xf] %v1826
      %1955 = vst [vmem:[#allocation3 + $0xcc] sm:$0xf] %v1827
      %1956 = vst [vmem:[#allocation3 + $0xd0] sm:$0xf] %v1828
      %1957 = vst [vmem:[#allocation3 + $0xd4] sm:$0xf] %v1829
      %1958 = vst [vmem:[#allocation3 + $0xd8] sm:$0xf] %v1830
      %1959 = vst [vmem:[#allocation3 + $0xdc] sm:$0xf] %v1831
      %1960 = vst [vmem:[#allocation3 + $0xe0] sm:$0xf] %v1832
      %1961 = vst [vmem:[#allocation3 + $0xe4] sm:$0xf] %v1833
      %1962 = vst [vmem:[#allocation3 + $0xe8] sm:$0xf] %v1834
      %1963 = vst [vmem:[#allocation3 + $0xec] sm:$0xf] %v1835
      %1964 = vst [vmem:[#allocation3 + $0xf0] sm:$0xf] %v1836
      %1965 = vst [vmem:[#allocation3 + $0xf4] sm:$0xf] %v1837
      %1966 = vst [vmem:[#allocation3 + $0xf8] sm:$0xf] %v1838
      %1967 = vst [vmem:[#allocation3 + $0xfc] sm:$0xf] %v1839
    $region25: #{tpu_custom_call.1} parent=1 // pred_fallthru
      _
    // Predicated region
    $region26: #{tpu_custom_call.1} parent=1 // pred_check
      _
    $region27: #{tpu_custom_call.1} parent=1 // pred_check_branch
      %1969 = sbr.rel (0) target = $region29
    $region28: #{tpu_custom_call.1} parent=1 // pred_region
      %s1971 = ssub.s32 4096, 4096
      %1972 = vsyncadd [#allocation4], %s1971
      %s1973 = sshll.u32 [#allocation3], 4
      %s1974 = int_to_ptr.vmem [resolvable:$true] %s1973
      %1979 = dma.vmem_to_hbm [thread:$0]  %s1974, 4096, %s4, [#allocation4], 64, 64, 4
    $region29: #{tpu_custom_call.1} parent=1 // pred_fallthru
      _
    // Predicated region
    $region30: #{tpu_custom_call.1} parent=1 // pred_check
      _
    $region31: #{tpu_custom_call.1} parent=1 // pred_check_branch
      %1981 = sbr.rel (0) target = $region33
    $region32: #{tpu_custom_call.1} parent=1 // pred_region
      %1982 = dma.done [#allocation4], 4096
    $region33: #{tpu_custom_call.1} parent=1 // pred_fallthru
      _
    %1983 = vsyncpa [#allocation4], 1

</llo_original>
